<compile_context>
chip_gen: v6e
topology: v6e:2x2x1
jax: 0.10.0
libtpu: 0.0.40
codegen_flags: <defaults>
</compile_context>

<pallas_src>
import functools

import jax
import jax.numpy as jnp
from jax import lax
from jax.experimental import pallas as pl
from jax.experimental.pallas import tpu as pltpu


# ----------------------------- Pallas kernel -----------------------------

def _ltca_kernel(x_ref, wq_ref, bq_ref, wk_ref, bk_ref, wv_ref, bv_ref,
                 g_ref, b_ref, tg_ref, tb_ref, o_ref, *, num_head, eps):
    # x_ref / o_ref: (T, D) tile for the current batch element.
    x = x_ref[...].astype(jnp.float32)
    T, D = x.shape
    H = num_head
    hd = D // H

    # --- LayerNorm statistics are shared (norm and text_norm see the same x) ---
    mean = jnp.mean(x, axis=-1, keepdims=True)
    xc = x - mean
    var = jnp.mean(xc * xc, axis=-1, keepdims=True)
    xhat = xc * lax.rsqrt(var + eps)
    xq = xhat * g_ref[...] + b_ref[...]      # self.norm(x)       -> query path
    xt = xhat * tg_ref[...] + tb_ref[...]    # self.text_norm(x)  -> key/value path

    # --- q/k/v projections (weights already (D_in, D_out)) ---
    q = jnp.dot(xq, wq_ref[...], preferred_element_type=jnp.float32) + bq_ref[...]
    k = jnp.dot(xt, wk_ref[...], preferred_element_type=jnp.float32) + bk_ref[...]
    v = jnp.dot(xt, wv_ref[...], preferred_element_type=jnp.float32) + bv_ref[...]

    # --- key softmax over the time axis (dim=1 of (B,T,H,hd) == axis 0 here) ---
    k = k - jnp.max(k, axis=0, keepdims=True)
    ek = jnp.exp(k)
    k = ek / jnp.sum(ek, axis=0, keepdims=True)

    # --- per-head linear attention ---
    for h in range(H):
        lo, hi = h * hd, (h + 1) * hd
        qh = q[:, lo:hi]
        qh = qh - jnp.max(qh, axis=-1, keepdims=True)
        eq = jnp.exp(qh)
        qh = eq / jnp.sum(eq, axis=-1, keepdims=True)        # softmax over head_dim
        kh = k[:, lo:hi]
        vh = v[:, lo:hi]
        # att[h] = sum_t kh[t,:] (x) vh[t,:]  -> (hd, hd); contract over T.
        ah = lax.dot_general(kh, vh, (((0,), (0,)), ((), ())),
                             preferred_element_type=jnp.float32)
        yh = jnp.dot(qh, ah, preferred_element_type=jnp.float32)   # (T, hd)
        # Stores land in the (T, D) VMEM output block; the HBM writeback of the
        # whole block is a single lane-dense DMA (D is a multiple of 128).
        o_ref[:, lo:hi] = yh.astype(o_ref.dtype)


def ltca_forward(params, x, *, num_head, eps=1e-5):
    """x: (T, B, D) float32 -> y: (B, T, D)   (matches the PyTorch forward)."""
    T, B, D = x.shape
    assert D % num_head == 0
    hd = D // num_head

    kernel = functools.partial(_ltca_kernel, num_head=num_head, eps=eps)

    if D % 128 == 0 or B == 1:
        # Fuse the (T,B,D)->(B,T,D) permute into the input pipeline: view x as
        # (T, B*D) (free reshape) and read the b-th D-wide column slab.
        x_in = x.reshape(T, B * D)
        x_spec = pl.BlockSpec((T, D), lambda b: (0, b))
    else:
        # Lane-unaligned D: materialize the permute once in the wrapper.
        x_in = jnp.transpose(x, (1, 0, 2))
        x_spec = pl.BlockSpec((None, T, D), lambda b: (b, 0, 0))

    def resident(shape):            # stays in VMEM for every grid step
        return pl.BlockSpec(shape, lambda b: (0, 0))

    cost = pl.CostEstimate(
        flops=B * (6 * T * D * D + 4 * T * D * hd),
        transcendentals=2 * B * T * D,                 # two softmax exps
        bytes_accessed=4 * (2 * B * T * D + 3 * D * D + 8 * D),
    )

    return pl.pallas_call(
        kernel,
        out_shape=jax.ShapeDtypeStruct((B, T, D), x.dtype),
        grid=(B,),
        in_specs=[
            x_spec,
            resident((D, D)), resident((1, D)),   # Wq, bq
            resident((D, D)), resident((1, D)),   # Wk, bk
            resident((D, D)), resident((1, D)),   # Wv, bv
            resident((1, D)), resident((1, D)),   # norm gamma / beta
            resident((1, D)), resident((1, D)),   # text_norm gamma / beta
        ],
        out_specs=pl.BlockSpec((None, T, D), lambda b: (b, 0, 0)),
        compiler_params=pltpu.CompilerParams(
            dimension_semantics=("parallel",)),
        cost_estimate=cost,
    )(x_in, params["wq"], params["bq"], params["wk"], params["bk"],
      params["wv"], params["bv"], params["g"], params["b"],
      params["tg"], params["tb"])


# ----------------------------- module wrapper -----------------------------

class LinearTemporalCrossAttention:
    """JAX/Pallas port of mdm.LinearTemporalCrossAttention (forward only)."""

    def __init__(self, seq_len, latent_dim, text_latent_dim, num_head,
                 dropout, time_embed_dim, key):
        assert latent_dim % num_head == 0
        # The PyTorch forward feeds x (dim = latent_dim) through text_norm /
        # key / value, so it only type-checks when the two dims are equal.
        assert text_latent_dim == latent_dim
        self.num_head = num_head
        self.latent_dim = latent_dim
        D = latent_dim
        ks = jax.random.split(key, 10)
        bound = 1.0 / (D ** 0.5)
        uni = lambda k, s: jax.random.uniform(k, s, jnp.float32, -bound, bound)
        # nn.Linear weights stored PRE-TRANSPOSED to (in, out): y = x @ W + b.
        self.params = {
            "wq": uni(ks[0], (D, D)), "bq": uni(ks[1], (1, D)),
            "wk": uni(ks[2], (D, D)), "bk": uni(ks[3], (1, D)),
            "wv": uni(ks[4], (D, D)), "bv": uni(ks[5], (1, D)),
            # LayerNorm affine params (randomized so norm != text_norm).
            "g":  1.0 + 0.1 * jax.random.normal(ks[6], (1, D), jnp.float32),
            "b":  0.1 * jax.random.normal(ks[7], (1, D), jnp.float32),
            "tg": 1.0 + 0.1 * jax.random.normal(ks[8], (1, D), jnp.float32),
            "tb": 0.1 * jax.random.normal(ks[9], (1, D), jnp.float32),
        }
        # TODO(synk): dropout and proj_out exist on the PyTorch module but are
        # never used in its forward(), so they are intentionally not lowered.

    def __call__(self, x, xf=None, emb=None):
        # xf / emb accepted but unused, exactly as in the PyTorch forward.
        return ltca_forward(self.params, x, num_head=self.num_head)


# ------------------------------ pure-JAX reference ------------------------

def _ref_forward(module, x):
    p = module.params
    H = module.num_head
    P = "highest"                                   # match in-kernel f32 matmuls
    xb = jnp.transpose(x, (1, 0, 2))                # (B, T, D)
    B, T, D = xb.shape

    def ln(z, g, b):
        m = jnp.mean(z, -1, keepdims=True)
        zc = z - m
        v = jnp.mean(zc * zc, -1, keepdims=True)
        return zc / jnp.sqrt(v + 1e-5) * g + b

    xq = ln(xb, p["g"], p["b"])
    xt = ln(xb, p["tg"], p["tb"])
    q = jnp.einsum("btd,de->bte", xq, p["wq"], precision=P) + p["bq"]
    k = jnp.einsum("btd,de->bte", xt, p["wk"], precision=P) + p["bk"]
    v = jnp.einsum("btd,de->bte", xt, p["wv"], precision=P) + p["bv"]
    q = jax.nn.softmax(q.reshape(B, T, H, -1), axis=-1)
    k = jax.nn.softmax(k.reshape(B, T, H, -1), axis=1)
    v = v.reshape(B, T, H, -1)
    att = jnp.einsum("bnhd,bnhl->bhdl", k, v, precision=P)
    y = jnp.einsum("bnhd,bhdl->bnhl", q, att, precision=P).reshape(B, T, D)
    return y


# -------------------------------- main -------------------------------------

if __name__ == "__main__":
    key = jax.random.PRNGKey(0)
    k_x, k_xf, k_p = jax.random.split(key, 3)

    # Small shapes consistent with the module: x is (T, B, D), like [240, 2, 256]
    # in the spec; D kept a multiple of 128 so all blocks are lane-dense.
    T, B, D, H = 16, 2, 128, 4
    x = jax.random.normal(k_x, (T, B, D), jnp.float32)
    xf = jax.random.normal(k_xf, (B, 4, D), jnp.float32)   # unused by forward

    m = LinearTemporalCrossAttention(
        seq_len=T, latent_dim=D, text_latent_dim=D, num_head=H,
        dropout=0.1, time_embed_dim=4 * D, key=k_p)

    y = jax.block_until_ready(m(x, xf))
    r = _ref_forward(m, x)

    assert y.shape == (B, T, D)
    max_err = float(jnp.max(jnp.abs(y - r)))
    # Tolerance covers MXU multi-pass f32 vs XLA precision differences.
    assert jnp.allclose(y, r, atol=1e-3, rtol=1e-3), max_err

    print("KERNEL_OK")
</pallas_src>

<mosaic_0001>
module attributes {stable_mosaic.version = 11 : i64} {
  func.func @_ltca_kernel(%arg0: i32, %arg1: memref<16x128xf32, #tpu.memory_space<vmem>>, %arg2: memref<128x128xf32, #tpu.memory_space<vmem>>, %arg3: memref<1x128xf32, #tpu.memory_space<vmem>>, %arg4: memref<128x128xf32, #tpu.memory_space<vmem>>, %arg5: memref<1x128xf32, #tpu.memory_space<vmem>>, %arg6: memref<128x128xf32, #tpu.memory_space<vmem>>, %arg7: memref<1x128xf32, #tpu.memory_space<vmem>>, %arg8: memref<1x128xf32, #tpu.memory_space<vmem>>, %arg9: memref<1x128xf32, #tpu.memory_space<vmem>>, %arg10: memref<1x128xf32, #tpu.memory_space<vmem>>, %arg11: memref<1x128xf32, #tpu.memory_space<vmem>>, %arg12: memref<1x16x128xf32, #tpu.memory_space<vmem>>) attributes {dimension_semantics = [#tpu.dimension_semantics<parallel>], iteration_bounds = array<i64: 2>, scalar_prefetch = 0 : i64, scratch_operands = 0 : i64, tpu.core_type = #tpu.core_type<tc>, window_params = [{transform_indices = @transform_0, window_bounds = array<i64: 16, 128>}, {pipeline_mode = #tpu.pipeline_mode<synchronous>, transform_indices = @transform_1, window_bounds = array<i64: 128, 128>}, {pipeline_mode = #tpu.pipeline_mode<synchronous>, transform_indices = @transform_2, window_bounds = array<i64: 1, 128>}, {pipeline_mode = #tpu.pipeline_mode<synchronous>, transform_indices = @transform_3, window_bounds = array<i64: 128, 128>}, {pipeline_mode = #tpu.pipeline_mode<synchronous>, transform_indices = @transform_4, window_bounds = array<i64: 1, 128>}, {pipeline_mode = #tpu.pipeline_mode<synchronous>, transform_indices = @transform_5, window_bounds = array<i64: 128, 128>}, {pipeline_mode = #tpu.pipeline_mode<synchronous>, transform_indices = @transform_6, window_bounds = array<i64: 1, 128>}, {pipeline_mode = #tpu.pipeline_mode<synchronous>, transform_indices = @transform_7, window_bounds = array<i64: 1, 128>}, {pipeline_mode = #tpu.pipeline_mode<synchronous>, transform_indices = @transform_8, window_bounds = array<i64: 1, 128>}, {pipeline_mode = #tpu.pipeline_mode<synchronous>, transform_indices = @transform_9, window_bounds = array<i64: 1, 128>}, {pipeline_mode = #tpu.pipeline_mode<synchronous>, transform_indices = @transform_10, window_bounds = array<i64: 1, 128>}, {transform_indices = @transform_11, window_bounds = array<i64: 1, 16, 128>}]} {
    %c0 = arith.constant 0 : index
    %c0_0 = arith.constant 0 : index
    %0 = vector.load %arg1[%c0, %c0_0] : memref<16x128xf32, #tpu.memory_space<vmem>>, vector<16x128xf32>
    %cst = arith.constant dense<0.000000e+00> : vector<16xf32>
    %1 = vector.multi_reduction <add>, %0, %cst [1] : vector<16x128xf32> to vector<16xf32>
    %2 = vector.shape_cast %1 : vector<16xf32> to vector<16x1xf32>
    %cst_1 = arith.constant 1.280000e+02 : f32
    %3 = vector.broadcast %cst_1 : f32 to vector<16x1xf32>
    %4 = arith.divf %2, %3 : vector<16x1xf32>
    %5 = vector.broadcast %4 : vector<16x1xf32> to vector<16x128xf32>
    %6 = arith.subf %0, %5 : vector<16x128xf32>
    %7 = arith.mulf %6, %6 : vector<16x128xf32>
    %cst_2 = arith.constant dense<0.000000e+00> : vector<16xf32>
    %8 = vector.multi_reduction <add>, %7, %cst_2 [1] : vector<16x128xf32> to vector<16xf32>
    %9 = vector.shape_cast %8 : vector<16xf32> to vector<16x1xf32>
    %cst_3 = arith.constant 1.280000e+02 : f32
    %10 = vector.broadcast %cst_3 : f32 to vector<16x1xf32>
    %11 = arith.divf %9, %10 : vector<16x1xf32>
    %cst_4 = arith.constant 9.99999974E-6 : f32
    %12 = vector.broadcast %cst_4 : f32 to vector<16x1xf32>
    %13 = arith.addf %11, %12 : vector<16x1xf32>
    %14 = math.rsqrt %13 : vector<16x1xf32>
    %15 = vector.broadcast %14 : vector<16x1xf32> to vector<16x128xf32>
    %16 = arith.mulf %6, %15 : vector<16x128xf32>
    %c0_5 = arith.constant 0 : index
    %c0_6 = arith.constant 0 : index
    %17 = vector.load %arg8[%c0_5, %c0_6] : memref<1x128xf32, #tpu.memory_space<vmem>>, vector<1x128xf32>
    %18 = vector.broadcast %17 : vector<1x128xf32> to vector<16x128xf32>
    %19 = arith.mulf %16, %18 : vector<16x128xf32>
    %c0_7 = arith.constant 0 : index
    %c0_8 = arith.constant 0 : index
    %20 = vector.load %arg9[%c0_7, %c0_8] : memref<1x128xf32, #tpu.memory_space<vmem>>, vector<1x128xf32>
    %21 = vector.broadcast %20 : vector<1x128xf32> to vector<16x128xf32>
    %22 = arith.addf %19, %21 : vector<16x128xf32>
    %c0_9 = arith.constant 0 : index
    %c0_10 = arith.constant 0 : index
    %23 = vector.load %arg10[%c0_9, %c0_10] : memref<1x128xf32, #tpu.memory_space<vmem>>, vector<1x128xf32>
    %24 = vector.broadcast %23 : vector<1x128xf32> to vector<16x128xf32>
    %25 = arith.mulf %16, %24 : vector<16x128xf32>
    %c0_11 = arith.constant 0 : index
    %c0_12 = arith.constant 0 : index
    %26 = vector.load %arg11[%c0_11, %c0_12] : memref<1x128xf32, #tpu.memory_space<vmem>>, vector<1x128xf32>
    %27 = vector.broadcast %26 : vector<1x128xf32> to vector<16x128xf32>
    %28 = arith.addf %25, %27 : vector<16x128xf32>
    %c0_13 = arith.constant 0 : index
    %c0_14 = arith.constant 0 : index
    %29 = vector.load %arg2[%c0_13, %c0_14] : memref<128x128xf32, #tpu.memory_space<vmem>>, vector<128x128xf32>
    %cst_15 = arith.constant dense<0.000000e+00> : vector<16x128xf32>
    %30 = tpu.matmul %22, %29, %cst_15 {dimension_numbers = #tpu.dot_dimension_numbers<[1], [0], [0], [1], [0, 0, 1, 1], [], []>} : vector<16x128xf32>, vector<128x128xf32>, vector<16x128xf32> -> vector<16x128xf32>
    %c0_16 = arith.constant 0 : index
    %c0_17 = arith.constant 0 : index
    %31 = vector.load %arg3[%c0_16, %c0_17] : memref<1x128xf32, #tpu.memory_space<vmem>>, vector<1x128xf32>
    %32 = vector.broadcast %31 : vector<1x128xf32> to vector<16x128xf32>
    %33 = arith.addf %30, %32 : vector<16x128xf32>
    %c0_18 = arith.constant 0 : index
    %c0_19 = arith.constant 0 : index
    %34 = vector.load %arg4[%c0_18, %c0_19] : memref<128x128xf32, #tpu.memory_space<vmem>>, vector<128x128xf32>
    %cst_20 = arith.constant dense<0.000000e+00> : vector<16x128xf32>
    %35 = tpu.matmul %28, %34, %cst_20 {dimension_numbers = #tpu.dot_dimension_numbers<[1], [0], [0], [1], [0, 0, 1, 1], [], []>} : vector<16x128xf32>, vector<128x128xf32>, vector<16x128xf32> -> vector<16x128xf32>
    %c0_21 = arith.constant 0 : index
    %c0_22 = arith.constant 0 : index
    %36 = vector.load %arg5[%c0_21, %c0_22] : memref<1x128xf32, #tpu.memory_space<vmem>>, vector<1x128xf32>
    %37 = vector.broadcast %36 : vector<1x128xf32> to vector<16x128xf32>
    %38 = arith.addf %35, %37 : vector<16x128xf32>
    %c0_23 = arith.constant 0 : index
    %c0_24 = arith.constant 0 : index
    %39 = vector.load %arg6[%c0_23, %c0_24] : memref<128x128xf32, #tpu.memory_space<vmem>>, vector<128x128xf32>
    %cst_25 = arith.constant dense<0.000000e+00> : vector<16x128xf32>
    %40 = tpu.matmul %28, %39, %cst_25 {dimension_numbers = #tpu.dot_dimension_numbers<[1], [0], [0], [1], [0, 0, 1, 1], [], []>} : vector<16x128xf32>, vector<128x128xf32>, vector<16x128xf32> -> vector<16x128xf32>
    %c0_26 = arith.constant 0 : index
    %c0_27 = arith.constant 0 : index
    %41 = vector.load %arg7[%c0_26, %c0_27] : memref<1x128xf32, #tpu.memory_space<vmem>>, vector<1x128xf32>
    %42 = vector.broadcast %41 : vector<1x128xf32> to vector<16x128xf32>
    %43 = arith.addf %40, %42 : vector<16x128xf32>
    %cst_28 = arith.constant dense<0xFF800000> : vector<128xf32>
    %44 = vector.multi_reduction <maximumf>, %38, %cst_28 [0] : vector<16x128xf32> to vector<128xf32>
    %45 = vector.shape_cast %44 : vector<128xf32> to vector<1x128xf32>
    %46 = vector.broadcast %45 : vector<1x128xf32> to vector<16x128xf32>
    %47 = arith.subf %38, %46 : vector<16x128xf32>
    %48 = math.exp %47 : vector<16x128xf32>
    %cst_29 = arith.constant dense<0.000000e+00> : vector<128xf32>
    %49 = vector.multi_reduction <add>, %48, %cst_29 [0] : vector<16x128xf32> to vector<128xf32>
    %50 = vector.shape_cast %49 : vector<128xf32> to vector<1x128xf32>
    %51 = vector.broadcast %50 : vector<1x128xf32> to vector<16x128xf32>
    %52 = arith.divf %48, %51 : vector<16x128xf32>
    %53 = vector.extract_strided_slice %33 {offsets = [0, 0], sizes = [16, 32], strides = [1, 1]} : vector<16x128xf32> to vector<16x32xf32>
    %cst_30 = arith.constant dense<0xFF800000> : vector<16xf32>
    %54 = vector.multi_reduction <maximumf>, %53, %cst_30 [1] : vector<16x32xf32> to vector<16xf32>
    %55 = vector.shape_cast %54 : vector<16xf32> to vector<16x1xf32>
    %56 = vector.broadcast %55 : vector<16x1xf32> to vector<16x32xf32>
    %57 = arith.subf %53, %56 : vector<16x32xf32>
    %58 = math.exp %57 : vector<16x32xf32>
    %cst_31 = arith.constant dense<0.000000e+00> : vector<16xf32>
    %59 = vector.multi_reduction <add>, %58, %cst_31 [1] : vector<16x32xf32> to vector<16xf32>
    %60 = vector.shape_cast %59 : vector<16xf32> to vector<16x1xf32>
    %61 = vector.broadcast %60 : vector<16x1xf32> to vector<16x32xf32>
    %62 = arith.divf %58, %61 : vector<16x32xf32>
    %63 = vector.extract_strided_slice %52 {offsets = [0, 0], sizes = [16, 32], strides = [1, 1]} : vector<16x128xf32> to vector<16x32xf32>
    %64 = vector.extract_strided_slice %43 {offsets = [0, 0], sizes = [16, 32], strides = [1, 1]} : vector<16x128xf32> to vector<16x32xf32>
    %cst_32 = arith.constant dense<0.000000e+00> : vector<32x32xf32>
    %65 = tpu.matmul %63, %64, %cst_32 {dimension_numbers = #tpu.dot_dimension_numbers<[0], [0], [1], [1], [0, 1, 1, 1], [], []>} : vector<16x32xf32>, vector<16x32xf32>, vector<32x32xf32> -> vector<32x32xf32>
    %cst_33 = arith.constant dense<0.000000e+00> : vector<16x32xf32>
    %66 = tpu.matmul %62, %65, %cst_33 {dimension_numbers = #tpu.dot_dimension_numbers<[1], [0], [0], [1], [0, 0, 1, 1], [], []>} : vector<16x32xf32>, vector<32x32xf32>, vector<16x32xf32> -> vector<16x32xf32>
    %c0_34 = arith.constant 0 : index
    %c0_35 = arith.constant 0 : index
    %c0_36 = arith.constant 0 : index
    %67 = vector.load %arg12[%c0_34, %c0_35, %c0_36] : memref<1x16x128xf32, #tpu.memory_space<vmem>>, vector<1x16x32xf32>
    %68 = vector.shape_cast %67 : vector<1x16x32xf32> to vector<16x32xf32>
    %69 = vector.shape_cast %66 : vector<16x32xf32> to vector<1x16x32xf32>
    tpu.vector_store %arg12[%c0_34, %c0_35, %c0_36], %69 {strides = array<i32>} : memref<1x16x128xf32, #tpu.memory_space<vmem>>, vector<1x16x32xf32>,
    %70 = vector.extract_strided_slice %33 {offsets = [0, 32], sizes = [16, 32], strides = [1, 1]} : vector<16x128xf32> to vector<16x32xf32>
    %cst_37 = arith.constant dense<0xFF800000> : vector<16xf32>
    %71 = vector.multi_reduction <maximumf>, %70, %cst_37 [1] : vector<16x32xf32> to vector<16xf32>
    %72 = vector.shape_cast %71 : vector<16xf32> to vector<16x1xf32>
    %73 = vector.broadcast %72 : vector<16x1xf32> to vector<16x32xf32>
    %74 = arith.subf %70, %73 : vector<16x32xf32>
    %75 = math.exp %74 : vector<16x32xf32>
    %cst_38 = arith.constant dense<0.000000e+00> : vector<16xf32>
    %76 = vector.multi_reduction <add>, %75, %cst_38 [1] : vector<16x32xf32> to vector<16xf32>
    %77 = vector.shape_cast %76 : vector<16xf32> to vector<16x1xf32>
    %78 = vector.broadcast %77 : vector<16x1xf32> to vector<16x32xf32>
    %79 = arith.divf %75, %78 : vector<16x32xf32>
    %80 = vector.extract_strided_slice %52 {offsets = [0, 32], sizes = [16, 32], strides = [1, 1]} : vector<16x128xf32> to vector<16x32xf32>
    %81 = vector.extract_strided_slice %43 {offsets = [0, 32], sizes = [16, 32], strides = [1, 1]} : vector<16x128xf32> to vector<16x32xf32>
    %cst_39 = arith.constant dense<0.000000e+00> : vector<32x32xf32>
    %82 = tpu.matmul %80, %81, %cst_39 {dimension_numbers = #tpu.dot_dimension_numbers<[0], [0], [1], [1], [0, 1, 1, 1], [], []>} : vector<16x32xf32>, vector<16x32xf32>, vector<32x32xf32> -> vector<32x32xf32>
    %cst_40 = arith.constant dense<0.000000e+00> : vector<16x32xf32>
    %83 = tpu.matmul %79, %82, %cst_40 {dimension_numbers = #tpu.dot_dimension_numbers<[1], [0], [0], [1], [0, 0, 1, 1], [], []>} : vector<16x32xf32>, vector<32x32xf32>, vector<16x32xf32> -> vector<16x32xf32>
    %c0_41 = arith.constant 0 : index
    %c0_42 = arith.constant 0 : index
    %c32 = arith.constant 32 : index
    %84 = vector.load %arg12[%c0_41, %c0_42, %c32] : memref<1x16x128xf32, #tpu.memory_space<vmem>>, vector<1x16x32xf32>
    %85 = vector.shape_cast %84 : vector<1x16x32xf32> to vector<16x32xf32>
    %86 = vector.shape_cast %83 : vector<16x32xf32> to vector<1x16x32xf32>
    tpu.vector_store %arg12[%c0_41, %c0_42, %c32], %86 {strides = array<i32>} : memref<1x16x128xf32, #tpu.memory_space<vmem>>, vector<1x16x32xf32>,
    %87 = vector.extract_strided_slice %33 {offsets = [0, 64], sizes = [16, 32], strides = [1, 1]} : vector<16x128xf32> to vector<16x32xf32>
    %cst_43 = arith.constant dense<0xFF800000> : vector<16xf32>
    %88 = vector.multi_reduction <maximumf>, %87, %cst_43 [1] : vector<16x32xf32> to vector<16xf32>
    %89 = vector.shape_cast %88 : vector<16xf32> to vector<16x1xf32>
    %90 = vector.broadcast %89 : vector<16x1xf32> to vector<16x32xf32>
    %91 = arith.subf %87, %90 : vector<16x32xf32>
    %92 = math.exp %91 : vector<16x32xf32>
    %cst_44 = arith.constant dense<0.000000e+00> : vector<16xf32>
    %93 = vector.multi_reduction <add>, %92, %cst_44 [1] : vector<16x32xf32> to vector<16xf32>
    %94 = vector.shape_cast %93 : vector<16xf32> to vector<16x1xf32>
    %95 = vector.broadcast %94 : vector<16x1xf32> to vector<16x32xf32>
    %96 = arith.divf %92, %95 : vector<16x32xf32>
    %97 = vector.extract_strided_slice %52 {offsets = [0, 64], sizes = [16, 32], strides = [1, 1]} : vector<16x128xf32> to vector<16x32xf32>
    %98 = vector.extract_strided_slice %43 {offsets = [0, 64], sizes = [16, 32], strides = [1, 1]} : vector<16x128xf32> to vector<16x32xf32>
    %cst_45 = arith.constant dense<0.000000e+00> : vector<32x32xf32>
    %99 = tpu.matmul %97, %98, %cst_45 {dimension_numbers = #tpu.dot_dimension_numbers<[0], [0], [1], [1], [0, 1, 1, 1], [], []>} : vector<16x32xf32>, vector<16x32xf32>, vector<32x32xf32> -> vector<32x32xf32>
    %cst_46 = arith.constant dense<0.000000e+00> : vector<16x32xf32>
    %100 = tpu.matmul %96, %99, %cst_46 {dimension_numbers = #tpu.dot_dimension_numbers<[1], [0], [0], [1], [0, 0, 1, 1], [], []>} : vector<16x32xf32>, vector<32x32xf32>, vector<16x32xf32> -> vector<16x32xf32>
    %c0_47 = arith.constant 0 : index
    %c0_48 = arith.constant 0 : index
    %c64 = arith.constant 64 : index
    %101 = vector.load %arg12[%c0_47, %c0_48, %c64] : memref<1x16x128xf32, #tpu.memory_space<vmem>>, vector<1x16x32xf32>
    %102 = vector.shape_cast %101 : vector<1x16x32xf32> to vector<16x32xf32>
    %103 = vector.shape_cast %100 : vector<16x32xf32> to vector<1x16x32xf32>
    tpu.vector_store %arg12[%c0_47, %c0_48, %c64], %103 {strides = array<i32>} : memref<1x16x128xf32, #tpu.memory_space<vmem>>, vector<1x16x32xf32>,
    %104 = vector.extract_strided_slice %33 {offsets = [0, 96], sizes = [16, 32], strides = [1, 1]} : vector<16x128xf32> to vector<16x32xf32>
    %cst_49 = arith.constant dense<0xFF800000> : vector<16xf32>
    %105 = vector.multi_reduction <maximumf>, %104, %cst_49 [1] : vector<16x32xf32> to vector<16xf32>
    %106 = vector.shape_cast %105 : vector<16xf32> to vector<16x1xf32>
    %107 = vector.broadcast %106 : vector<16x1xf32> to vector<16x32xf32>
    %108 = arith.subf %104, %107 : vector<16x32xf32>
    %109 = math.exp %108 : vector<16x32xf32>
    %cst_50 = arith.constant dense<0.000000e+00> : vector<16xf32>
    %110 = vector.multi_reduction <add>, %109, %cst_50 [1] : vector<16x32xf32> to vector<16xf32>
    %111 = vector.shape_cast %110 : vector<16xf32> to vector<16x1xf32>
    %112 = vector.broadcast %111 : vector<16x1xf32> to vector<16x32xf32>
    %113 = arith.divf %109, %112 : vector<16x32xf32>
    %114 = vector.extract_strided_slice %52 {offsets = [0, 96], sizes = [16, 32], strides = [1, 1]} : vector<16x128xf32> to vector<16x32xf32>
    %115 = vector.extract_strided_slice %43 {offsets = [0, 96], sizes = [16, 32], strides = [1, 1]} : vector<16x128xf32> to vector<16x32xf32>
    %cst_51 = arith.constant dense<0.000000e+00> : vector<32x32xf32>
    %116 = tpu.matmul %114, %115, %cst_51 {dimension_numbers = #tpu.dot_dimension_numbers<[0], [0], [1], [1], [0, 1, 1, 1], [], []>} : vector<16x32xf32>, vector<16x32xf32>, vector<32x32xf32> -> vector<32x32xf32>
    %cst_52 = arith.constant dense<0.000000e+00> : vector<16x32xf32>
    %117 = tpu.matmul %113, %116, %cst_52 {dimension_numbers = #tpu.dot_dimension_numbers<[1], [0], [0], [1], [0, 0, 1, 1], [], []>} : vector<16x32xf32>, vector<32x32xf32>, vector<16x32xf32> -> vector<16x32xf32>
    %c0_53 = arith.constant 0 : index
    %c0_54 = arith.constant 0 : index
    %c96 = arith.constant 96 : index
    %118 = vector.load %arg12[%c0_53, %c0_54, %c96] : memref<1x16x128xf32, #tpu.memory_space<vmem>>, vector<1x16x32xf32>
    %119 = vector.shape_cast %118 : vector<1x16x32xf32> to vector<16x32xf32>
    %120 = vector.shape_cast %117 : vector<16x32xf32> to vector<1x16x32xf32>
    tpu.vector_store %arg12[%c0_53, %c0_54, %c96], %120 {strides = array<i32>} : memref<1x16x128xf32, #tpu.memory_space<vmem>>, vector<1x16x32xf32>,
    return
  }
  func.func @transform_0(%arg0: i32) -> (i32, i32) {
    %c0_i32 = arith.constant 0 : i32
    %c0_i32_0 = arith.constant 0 : i32
    return %c0_i32, %arg0 : i32, i32
  }
  func.func @transform_1(%arg0: i32) -> (i32, i32) {
    %c0_i32 = arith.constant 0 : i32
    %c0_i32_0 = arith.constant 0 : i32
    %c0_i32_1 = arith.constant 0 : i32
    return %c0_i32, %c0_i32_0 : i32, i32
  }
  func.func @transform_2(%arg0: i32) -> (i32, i32) {
    %c0_i32 = arith.constant 0 : i32
    %c0_i32_0 = arith.constant 0 : i32
    %c0_i32_1 = arith.constant 0 : i32
    return %c0_i32, %c0_i32_0 : i32, i32
  }
  func.func @transform_3(%arg0: i32) -> (i32, i32) {
    %c0_i32 = arith.constant 0 : i32
    %c0_i32_0 = arith.constant 0 : i32
    %c0_i32_1 = arith.constant 0 : i32
    return %c0_i32, %c0_i32_0 : i32, i32
  }
  func.func @transform_4(%arg0: i32) -> (i32, i32) {
    %c0_i32 = arith.constant 0 : i32
    %c0_i32_0 = arith.constant 0 : i32
    %c0_i32_1 = arith.constant 0 : i32
    return %c0_i32, %c0_i32_0 : i32, i32
  }
  func.func @transform_5(%arg0: i32) -> (i32, i32) {
    %c0_i32 = arith.constant 0 : i32
    %c0_i32_0 = arith.constant 0 : i32
    %c0_i32_1 = arith.constant 0 : i32
    return %c0_i32, %c0_i32_0 : i32, i32
  }
  func.func @transform_6(%arg0: i32) -> (i32, i32) {
    %c0_i32 = arith.constant 0 : i32
    %c0_i32_0 = arith.constant 0 : i32
    %c0_i32_1 = arith.constant 0 : i32
    return %c0_i32, %c0_i32_0 : i32, i32
  }
  func.func @transform_7(%arg0: i32) -> (i32, i32) {
    %c0_i32 = arith.constant 0 : i32
    %c0_i32_0 = arith.constant 0 : i32
    %c0_i32_1 = arith.constant 0 : i32
    return %c0_i32, %c0_i32_0 : i32, i32
  }
  func.func @transform_8(%arg0: i32) -> (i32, i32) {
    %c0_i32 = arith.constant 0 : i32
    %c0_i32_0 = arith.constant 0 : i32
    %c0_i32_1 = arith.constant 0 : i32
    return %c0_i32, %c0_i32_0 : i32, i32
  }
  func.func @transform_9(%arg0: i32) -> (i32, i32) {
    %c0_i32 = arith.constant 0 : i32
    %c0_i32_0 = arith.constant 0 : i32
    %c0_i32_1 = arith.constant 0 : i32
    return %c0_i32, %c0_i32_0 : i32, i32
  }
  func.func @transform_10(%arg0: i32) -> (i32, i32) {
    %c0_i32 = arith.constant 0 : i32
    %c0_i32_0 = arith.constant 0 : i32
    %c0_i32_1 = arith.constant 0 : i32
    return %c0_i32, %c0_i32_0 : i32, i32
  }
  func.func @transform_11(%arg0: i32) -> (i32, i32, i32) {
    %c0_i32 = arith.constant 0 : i32
    %c0_i32_0 = arith.constant 0 : i32
    %c0_i32_1 = arith.constant 0 : i32
    return %arg0, %c0_i32, %c0_i32_0 : i32, i32, i32
  }
}

</mosaic_0001>

<llo_original>
// kernel: tpu_custom_call.1
$region0: #{tpu_custom_call.1}
  #allocation0 [shape = 'u32[]', space=smem, size = 0x4, offset = 0x4, fixed_abs, tag = 'smem constant byte address 0x4 - core index']
  #allocation1 [shape = 'u32[144,128]{1,0:T(1,128)}', space=vmem, size = 0x12000, scoped, tag = 'internal scratch']
  %s0 = inlined_call_operand.hbm [shape: f32[16,256], index: 0, kind: input, shape index: {}]
  %s1 = inlined_call_operand.hbm [shape: f32[128,128], index: 1, kind: input, shape index: {}]
  %s2 = inlined_call_operand.vmem [shape: f32[1,128], index: 2, kind: input, shape index: {}]
  %s3 = inlined_call_operand.hbm [shape: f32[128,128], index: 3, kind: input, shape index: {}]
  %s4 = inlined_call_operand.vmem [shape: f32[1,128], index: 4, kind: input, shape index: {}]
  %s5 = inlined_call_operand.hbm [shape: f32[128,128], index: 5, kind: input, shape index: {}]
  %s6 = inlined_call_operand.vmem [shape: f32[1,128], index: 6, kind: input, shape index: {}]
  %s7 = inlined_call_operand.vmem [shape: f32[1,128], index: 7, kind: input, shape index: {}]
  %s8 = inlined_call_operand.vmem [shape: f32[1,128], index: 8, kind: input, shape index: {}]
  %s9 = inlined_call_operand.vmem [shape: f32[1,128], index: 9, kind: input, shape index: {}]
  %s10 = inlined_call_operand.vmem [shape: f32[1,128], index: 10, kind: input, shape index: {}]
  %s11 = inlined_call_operand.hbm [shape: f32[2,16,128], index: 11, kind: output, shape index: {}]
  %s12 = sld [smem:[#allocation0]]
  $region93: #{tpu_custom_call.1} parent=0
    _
  %s14 = ssub.s32 1, %s12
  %s15 = scalar_select 0, %s14, %s12
  $region1: #{tpu_custom_call.1} parent=0
    #allocation2 [shape = 'u8[16384]{0}', space=vmem, size = 0x4000, scoped, tag = 'input window, operand 0']
    #allocation3 [shape = 's32[2]{0}', space=sflag, size = 0x8, scoped, tag = 'scoped memory for tpu_custom_call.1']
    #allocation4 [shape = 's32[2]{0}', space=sflag, size = 0x8, scoped, tag = 'scoped memory for tpu_custom_call.1']
    #allocation5 [shape = 'u8[65536]{0}', space=vmem, size = 0x10000, scoped, tag = 'input window, operand 1, single buffered']
    #allocation6 [shape = 's32[1]{0}', space=sflag, size = 0x4, scoped, tag = 'scoped memory for tpu_custom_call.1']
    #allocation7 [shape = 'u8[65536]{0}', space=vmem, size = 0x10000, scoped, tag = 'input window, operand 3, single buffered']
    #allocation8 [shape = 'u8[65536]{0}', space=vmem, size = 0x10000, scoped, tag = 'input window, operand 5, single buffered']
    #allocation9 [shape = 's32[1]{0}', space=sflag, size = 0x4, scoped, tag = 'scoped memory for tpu_custom_call.1']
    #allocation10 [shape = 'u8[16384]{0}', space=vmem, size = 0x4000, scoped, tag = 'output window, operand 0']
    %16 = vsyncpa [#allocation3], 0
    %s17 = scalar_lea.sflag [#allocation3], 1
    %18 = vsyncpa %s17, 0
    %19 = vsyncpa [#allocation6], 0
    %20 = vsyncpa [#allocation9], 0
    %21 = vsyncpa [#allocation4], 0
    %s22 = scalar_lea.sflag [#allocation4], 1
    %23 = vsyncpa %s22, 0
    loop: start=0, step=1, limit=4
    $region2: #{tpu_custom_call.1} parent=1 // loop_pre_header
      _
    $region3: #{tpu_custom_call.1} parent=1 // loop_header
      %s25 = sphi 0, %s29
      %p26 = scmp.ge.s32.totalorder %s25, 4
      %s35 = sphi 0, %s37
      %s38 = sphi 0, %s35
      %s39 = sphi 0, %s38
      %s55 = sphi 0, %s39
      %s59 = sphi 0, %s59
      %s61 = sphi 0, %s59
      %s62 = sphi 0, %s61
      %s76 = sphi 0, %s62
      %s80 = sphi 0, %s80
      %s82 = sphi 0, %s80
      %s83 = sphi 0, %s82
      %s97 = sphi 0, %s83
      %s101 = sphi 0, %s101
      %s103 = sphi 0, %s101
      %s104 = sphi 0, %s103
      %s118 = sphi 0, %s104
      %s122 = sphi 0, %s122
      %s124 = sphi 0, %s122
      %s125 = sphi 0, %s124
      %s139 = sphi 0, %s125
      %s143 = sphi 0, %s143
      %s145 = sphi 0, %s143
      %s146 = sphi 0, %s145
      %s160 = sphi 0, %s146
      %s164 = sphi 0, %s164
      %s166 = sphi 0, %s164
      %s167 = sphi 0, %s166
      %s181 = sphi 0, %s167
      %s185 = sphi 0, %s185
      %s187 = sphi 0, %s185
      %s188 = sphi 0, %s187
      %s202 = sphi 0, %s188
      %s206 = sphi 0, %s206
      %s208 = sphi 0, %s206
      %s209 = sphi 0, %s208
      %s223 = sphi 0, %s209
      %s227 = sphi 0, %s227
      %s229 = sphi 0, %s227
      %s230 = sphi 0, %s229
      %s244 = sphi 0, %s230
      %s248 = sphi 0, %s248
      %s250 = sphi 0, %s248
      %s251 = sphi 0, %s250
      %s265 = sphi 0, %s251
      %s271 = sphi 0, %s273
      %s274 = sphi 0, %s271
      %s275 = sphi 0, %s274
      %s291 = sphi 0, %s275
    $region4: #{tpu_custom_call.1} parent=1 // loop_header_branch
      %28 = sbr.rel (%p26) target = $region8
    $region5: #{tpu_custom_call.1} parent=1 // loop_body
      %s30 = ssub.s32 %s25, 1
      %s31 = ssub.s32 %s25, 2
      %s32 = sadd.s32 %s25, 1
      %s33 = ssub.s32 %s25, %s32
      %p34 = scmp.eq.s32.totalorder %s33, 0
      %s36 = sadd.s32 %s35, 1
      %s37 = scalar_select %p34, %s35, %s36
      %p40 = pneg %p34
      %p41 = scmp.eq.s32.totalorder %s25, 1
      %p42 = por %p40, %p41
      %p43 = scmp.ne.s32.totalorder %s35, %s38
      %p44 = scmp.eq.s32.totalorder %s25, 0
      %p45 = por %p43, %p44
      %p46 = scmp.ne.s32.totalorder %s35, %s38
      %p47 = scmp.eq.s32.totalorder %s30, 1
      %p48 = por %p46, %p47
      %p49 = scmp.ne.s32.totalorder %s38, %s39
      %p50 = scmp.eq.s32.totalorder %s30, 0
      %p51 = por %p49, %p50
      %p52 = scmp.ne.s32.totalorder %s38, %s39
      %p53 = scmp.eq.s32.totalorder %s31, 1
      %p54 = por %p52, %p53
      %p56 = scmp.ne.s32.totalorder %s39, %s55
      %p57 = scmp.eq.s32.totalorder %s31, 0
      %p58 = por %p56, %p57
      %s60 = sadd.s32 %s59, 1
      %p63 = scmp.eq.s32.totalorder %s25, 1
      %p64 = scmp.ne.s32.totalorder %s59, %s61
      %p65 = scmp.eq.s32.totalorder %s25, 0
      %p66 = por %p64, %p65
      %p67 = scmp.ne.s32.totalorder %s59, %s61
      %p68 = scmp.eq.s32.totalorder %s30, 1
      %p69 = por %p67, %p68
      %p70 = scmp.ne.s32.totalorder %s61, %s62
      %p71 = scmp.eq.s32.totalorder %s30, 0
      %p72 = por %p70, %p71
      %p73 = scmp.ne.s32.totalorder %s61, %s62
      %p74 = scmp.eq.s32.totalorder %s31, 1
      %p75 = por %p73, %p74
      %p77 = scmp.ne.s32.totalorder %s62, %s76
      %p78 = scmp.eq.s32.totalorder %s31, 0
      %p79 = por %p77, %p78
      %s81 = sadd.s32 %s80, 1
      %p84 = scmp.eq.s32.totalorder %s25, 1
      %p85 = scmp.ne.s32.totalorder %s80, %s82
      %p86 = scmp.eq.s32.totalorder %s25, 0
      %p87 = por %p85, %p86
      %p88 = scmp.ne.s32.totalorder %s80, %s82
      %p89 = scmp.eq.s32.totalorder %s30, 1
      %p90 = por %p88, %p89
      %p91 = scmp.ne.s32.totalorder %s82, %s83
      %p92 = scmp.eq.s32.totalorder %s30, 0
      %p93 = por %p91, %p92
      %p94 = scmp.ne.s32.totalorder %s82, %s83
      %p95 = scmp.eq.s32.totalorder %s31, 1
      %p96 = por %p94, %p95
      %p98 = scmp.ne.s32.totalorder %s83, %s97
      %p99 = scmp.eq.s32.totalorder %s31, 0
      %p100 = por %p98, %p99
      %s102 = sadd.s32 %s101, 1
      %p105 = scmp.eq.s32.totalorder %s25, 1
      %p106 = scmp.ne.s32.totalorder %s101, %s103
      %p107 = scmp.eq.s32.totalorder %s25, 0
      %p108 = por %p106, %p107
      %p109 = scmp.ne.s32.totalorder %s101, %s103
      %p110 = scmp.eq.s32.totalorder %s30, 1
      %p111 = por %p109, %p110
      %p112 = scmp.ne.s32.totalorder %s103, %s104
      %p113 = scmp.eq.s32.totalorder %s30, 0
      %p114 = por %p112, %p113
      %p115 = scmp.ne.s32.totalorder %s103, %s104
      %p116 = scmp.eq.s32.totalorder %s31, 1
      %p117 = por %p115, %p116
      %p119 = scmp.ne.s32.totalorder %s104, %s118
      %p120 = scmp.eq.s32.totalorder %s31, 0
      %p121 = por %p119, %p120
      %s123 = sadd.s32 %s122, 1
      %p126 = scmp.eq.s32.totalorder %s25, 1
      %p127 = scmp.ne.s32.totalorder %s122, %s124
      %p128 = scmp.eq.s32.totalorder %s25, 0
      %p129 = por %p127, %p128
      %p130 = scmp.ne.s32.totalorder %s122, %s124
      %p131 = scmp.eq.s32.totalorder %s30, 1
      %p132 = por %p130, %p131
      %p133 = scmp.ne.s32.totalorder %s124, %s125
      %p134 = scmp.eq.s32.totalorder %s30, 0
      %p135 = por %p133, %p134
      %p136 = scmp.ne.s32.totalorder %s124, %s125
      %p137 = scmp.eq.s32.totalorder %s31, 1
      %p138 = por %p136, %p137
      %p140 = scmp.ne.s32.totalorder %s125, %s139
      %p141 = scmp.eq.s32.totalorder %s31, 0
      %p142 = por %p140, %p141
      %s144 = sadd.s32 %s143, 1
      %p147 = scmp.eq.s32.totalorder %s25, 1
      %p148 = scmp.ne.s32.totalorder %s143, %s145
      %p149 = scmp.eq.s32.totalorder %s25, 0
      %p150 = por %p148, %p149
      %p151 = scmp.ne.s32.totalorder %s143, %s145
      %p152 = scmp.eq.s32.totalorder %s30, 1
      %p153 = por %p151, %p152
      %p154 = scmp.ne.s32.totalorder %s145, %s146
      %p155 = scmp.eq.s32.totalorder %s30, 0
      %p156 = por %p154, %p155
      %p157 = scmp.ne.s32.totalorder %s145, %s146
      %p158 = scmp.eq.s32.totalorder %s31, 1
      %p159 = por %p157, %p158
      %p161 = scmp.ne.s32.totalorder %s146, %s160
      %p162 = scmp.eq.s32.totalorder %s31, 0
      %p163 = por %p161, %p162
      %s165 = sadd.s32 %s164, 1
      %p168 = scmp.eq.s32.totalorder %s25, 1
      %p169 = scmp.ne.s32.totalorder %s164, %s166
      %p170 = scmp.eq.s32.totalorder %s25, 0
      %p171 = por %p169, %p170
      %p172 = scmp.ne.s32.totalorder %s164, %s166
      %p173 = scmp.eq.s32.totalorder %s30, 1
      %p174 = por %p172, %p173
      %p175 = scmp.ne.s32.totalorder %s166, %s167
      %p176 = scmp.eq.s32.totalorder %s30, 0
      %p177 = por %p175, %p176
      %p178 = scmp.ne.s32.totalorder %s166, %s167
      %p179 = scmp.eq.s32.totalorder %s31, 1
      %p180 = por %p178, %p179
      %p182 = scmp.ne.s32.totalorder %s167, %s181
      %p183 = scmp.eq.s32.totalorder %s31, 0
      %p184 = por %p182, %p183
      %s186 = sadd.s32 %s185, 1
      %p189 = scmp.eq.s32.totalorder %s25, 1
      %p190 = scmp.ne.s32.totalorder %s185, %s187
      %p191 = scmp.eq.s32.totalorder %s25, 0
      %p192 = por %p190, %p191
      %p193 = scmp.ne.s32.totalorder %s185, %s187
      %p194 = scmp.eq.s32.totalorder %s30, 1
      %p195 = por %p193, %p194
      %p196 = scmp.ne.s32.totalorder %s187, %s188
      %p197 = scmp.eq.s32.totalorder %s30, 0
      %p198 = por %p196, %p197
      %p199 = scmp.ne.s32.totalorder %s187, %s188
      %p200 = scmp.eq.s32.totalorder %s31, 1
      %p201 = por %p199, %p200
      %p203 = scmp.ne.s32.totalorder %s188, %s202
      %p204 = scmp.eq.s32.totalorder %s31, 0
      %p205 = por %p203, %p204
      %s207 = sadd.s32 %s206, 1
      %p210 = scmp.eq.s32.totalorder %s25, 1
      %p211 = scmp.ne.s32.totalorder %s206, %s208
      %p212 = scmp.eq.s32.totalorder %s25, 0
      %p213 = por %p211, %p212
      %p214 = scmp.ne.s32.totalorder %s206, %s208
      %p215 = scmp.eq.s32.totalorder %s30, 1
      %p216 = por %p214, %p215
      %p217 = scmp.ne.s32.totalorder %s208, %s209
      %p218 = scmp.eq.s32.totalorder %s30, 0
      %p219 = por %p217, %p218
      %p220 = scmp.ne.s32.totalorder %s208, %s209
      %p221 = scmp.eq.s32.totalorder %s31, 1
      %p222 = por %p220, %p221
      %p224 = scmp.ne.s32.totalorder %s209, %s223
      %p225 = scmp.eq.s32.totalorder %s31, 0
      %p226 = por %p224, %p225
      %s228 = sadd.s32 %s227, 1
      %p231 = scmp.eq.s32.totalorder %s25, 1
      %p232 = scmp.ne.s32.totalorder %s227, %s229
      %p233 = scmp.eq.s32.totalorder %s25, 0
      %p234 = por %p232, %p233
      %p235 = scmp.ne.s32.totalorder %s227, %s229
      %p236 = scmp.eq.s32.totalorder %s30, 1
      %p237 = por %p235, %p236
      %p238 = scmp.ne.s32.totalorder %s229, %s230
      %p239 = scmp.eq.s32.totalorder %s30, 0
      %p240 = por %p238, %p239
      %p241 = scmp.ne.s32.totalorder %s229, %s230
      %p242 = scmp.eq.s32.totalorder %s31, 1
      %p243 = por %p241, %p242
      %p245 = scmp.ne.s32.totalorder %s230, %s244
      %p246 = scmp.eq.s32.totalorder %s31, 0
      %p247 = por %p245, %p246
      %s249 = sadd.s32 %s248, 1
      %p252 = scmp.eq.s32.totalorder %s25, 1
      %p253 = scmp.ne.s32.totalorder %s248, %s250
      %p254 = scmp.eq.s32.totalorder %s25, 0
      %p255 = por %p253, %p254
      %p256 = scmp.ne.s32.totalorder %s248, %s250
      %p257 = scmp.eq.s32.totalorder %s30, 1
      %p258 = por %p256, %p257
      %p259 = scmp.ne.s32.totalorder %s250, %s251
      %p260 = scmp.eq.s32.totalorder %s30, 0
      %p261 = por %p259, %p260
      %p262 = scmp.ne.s32.totalorder %s250, %s251
      %p263 = scmp.eq.s32.totalorder %s31, 1
      %p264 = por %p262, %p263
      %p266 = scmp.ne.s32.totalorder %s251, %s265
      %p267 = scmp.eq.s32.totalorder %s31, 0
      %p268 = por %p266, %p267
      %s269 = ssub.s32 %s25, %s32
      %p270 = scmp.eq.s32.totalorder %s269, 0
      %s272 = sadd.s32 %s271, 1
      %s273 = scalar_select %p270, %s271, %s272
      %p276 = pneg %p270
      %p277 = scmp.eq.s32.totalorder %s25, 1
      %p278 = por %p276, %p277
      %p279 = scmp.ne.s32.totalorder %s271, %s274
      %p280 = scmp.eq.s32.totalorder %s25, 0
      %p281 = por %p279, %p280
      %p282 = scmp.ne.s32.totalorder %s271, %s274
      %p283 = scmp.eq.s32.totalorder %s30, 1
      %p284 = por %p282, %p283
      %p285 = scmp.ne.s32.totalorder %s274, %s275
      %p286 = scmp.eq.s32.totalorder %s30, 0
      %p287 = por %p285, %p286
      %p288 = scmp.ne.s32.totalorder %s274, %s275
      %p289 = scmp.eq.s32.totalorder %s31, 1
      %p290 = por %p288, %p289
      %p292 = scmp.ne.s32.totalorder %s275, %s291
      %p293 = scmp.eq.s32.totalorder %s31, 0
      %p294 = por %p292, %p293
      %p295 = scmp.le.s32.totalorder 1, %s25
      %p296 = scmp.lt.s32.totalorder %s25, 3
      %p297 = pnand %p295, %p296
      %p298 = pneg %p297
      // Predicated region
      $region9: #{tpu_custom_call.1} parent=5 // pred_check
        _
      $region10: #{tpu_custom_call.1} parent=5 // pred_check_branch
        %300 = sbr.rel (%p297) target = $region12
      $region11: #{tpu_custom_call.1} parent=5 // pred_region
        %s301 = ssub.s32 %s25, 1
        // Predicated region
        $region13: #{tpu_custom_call.1} parent=11 // pred_check
          %p302 = pneg %p72
        $region14: #{tpu_custom_call.1} parent=11 // pred_check_branch
          %304 = sbr.rel (%p302) target = $region16
        $region15: #{tpu_custom_call.1} parent=11 // pred_region
          %s306 = ssub.s32 2048, 2048
          %307 = vsyncadd [#allocation6], %s306
          %s308 = sshll.u32 [#allocation5], 4
          %s309 = int_to_ptr.vmem [resolvable:$true] %s308
          %314 = dma.hbm_to_vmem [thread:$0]  %s1, 2048, %s309, [#allocation6], 128, 128, 8
        $region16: #{tpu_custom_call.1} parent=11 // pred_fallthru
          _
        // Predicated region
        $region17: #{tpu_custom_call.1} parent=11 // pred_check
          %p315 = pneg %p93
        $region18: #{tpu_custom_call.1} parent=11 // pred_check_branch
          %317 = sbr.rel (%p315) target = $region20
        $region19: #{tpu_custom_call.1} parent=11 // pred_region
          _
        $region20: #{tpu_custom_call.1} parent=11 // pred_fallthru
          _
        // Predicated region
        $region21: #{tpu_custom_call.1} parent=11 // pred_check
          %p318 = pneg %p114
        $region22: #{tpu_custom_call.1} parent=11 // pred_check_branch
          %320 = sbr.rel (%p318) target = $region24
        $region23: #{tpu_custom_call.1} parent=11 // pred_region
          %s322 = ssub.s32 2048, 2048
          %323 = vsyncadd [#allocation6], %s322
          %s324 = sshll.u32 [#allocation7], 4
          %s325 = int_to_ptr.vmem [resolvable:$true] %s324
          %330 = dma.hbm_to_vmem [thread:$0]  %s3, 2048, %s325, [#allocation6], 128, 128, 8
        $region24: #{tpu_custom_call.1} parent=11 // pred_fallthru
          _
        // Predicated region
        $region25: #{tpu_custom_call.1} parent=11 // pred_check
          %p331 = pneg %p135
        $region26: #{tpu_custom_call.1} parent=11 // pred_check_branch
          %333 = sbr.rel (%p331) target = $region28
        $region27: #{tpu_custom_call.1} parent=11 // pred_region
          _
        $region28: #{tpu_custom_call.1} parent=11 // pred_fallthru
          _
        // Predicated region
        $region29: #{tpu_custom_call.1} parent=11 // pred_check
          %p334 = pneg %p156
        $region30: #{tpu_custom_call.1} parent=11 // pred_check_branch
          %336 = sbr.rel (%p334) target = $region32
        $region31: #{tpu_custom_call.1} parent=11 // pred_region
          %s338 = ssub.s32 2048, 2048
          %339 = vsyncadd [#allocation9], %s338
          %s340 = sshll.u32 [#allocation8], 4
          %s341 = int_to_ptr.vmem [resolvable:$true] %s340
          %346 = dma.hbm_to_vmem [thread:$0]  %s5, 2048, %s341, [#allocation9], 128, 128, 8
        $region32: #{tpu_custom_call.1} parent=11 // pred_fallthru
          _
        // Predicated region
        $region33: #{tpu_custom_call.1} parent=11 // pred_check
          %p347 = pneg %p177
        $region34: #{tpu_custom_call.1} parent=11 // pred_check_branch
          %349 = sbr.rel (%p347) target = $region36
        $region35: #{tpu_custom_call.1} parent=11 // pred_region
          _
        $region36: #{tpu_custom_call.1} parent=11 // pred_fallthru
          _
        // Predicated region
        $region37: #{tpu_custom_call.1} parent=11 // pred_check
          %p350 = pneg %p198
        $region38: #{tpu_custom_call.1} parent=11 // pred_check_branch
          %352 = sbr.rel (%p350) target = $region40
        $region39: #{tpu_custom_call.1} parent=11 // pred_region
          _
        $region40: #{tpu_custom_call.1} parent=11 // pred_fallthru
          _
        // Predicated region
        $region41: #{tpu_custom_call.1} parent=11 // pred_check
          %p353 = pneg %p219
        $region42: #{tpu_custom_call.1} parent=11 // pred_check_branch
          %355 = sbr.rel (%p353) target = $region44
        $region43: #{tpu_custom_call.1} parent=11 // pred_region
          _
        $region44: #{tpu_custom_call.1} parent=11 // pred_fallthru
          _
        // Predicated region
        $region45: #{tpu_custom_call.1} parent=11 // pred_check
          %p356 = pneg %p240
        $region46: #{tpu_custom_call.1} parent=11 // pred_check_branch
          %358 = sbr.rel (%p356) target = $region48
        $region47: #{tpu_custom_call.1} parent=11 // pred_region
          _
        $region48: #{tpu_custom_call.1} parent=11 // pred_fallthru
          _
        // Predicated region
        $region49: #{tpu_custom_call.1} parent=11 // pred_check
          %p359 = pneg %p261
        $region50: #{tpu_custom_call.1} parent=11 // pred_check_branch
          %361 = sbr.rel (%p359) target = $region52
        $region51: #{tpu_custom_call.1} parent=11 // pred_region
          _
        $region52: #{tpu_custom_call.1} parent=11 // pred_fallthru
          _
      $region12: #{tpu_custom_call.1} parent=5 // pred_fallthru
        _
      %p362 = scmp.lt.s32.totalorder %s25, 2
      // Predicated region
      $region53: #{tpu_custom_call.1} parent=5 // pred_check
        %p363 = pneg %p362
      $region54: #{tpu_custom_call.1} parent=5 // pred_check_branch
        %365 = sbr.rel (%p363) target = $region56
      $region55: #{tpu_custom_call.1} parent=5 // pred_region
        // Predicated region
        $region57: #{tpu_custom_call.1} parent=55 // pred_check
          %p366 = pneg %p45
        $region58: #{tpu_custom_call.1} parent=55 // pred_check_branch
          %368 = sbr.rel (%p366) target = $region60
        $region59: #{tpu_custom_call.1} parent=55 // pred_region
          %s369 = sand.u32 %s35, 1
          %s370 = scalar_lea.sflag [#allocation3], %s369
          %s371 = sand.u32 %s35, 1
          %s372 = smul.addr %s371, 16
          %s373 = scalar_lea.vmem [#allocation2], %s372
          %s375 = ssub.s32 256, 256
          %376 = vsyncadd %s370, %s375
          %s377 = smul.addr %s25, 128
          %s378 = scalar_lea.hbm %s0, %s377
          %s379 = sshll.u32 %s373, 4
          %s380 = int_to_ptr.vmem [resolvable:$true] %s379
          %385 = dma.hbm_to_vmem [thread:$0]  %s378, 256, %s380, %s370, 256, 128, 8
        $region60: #{tpu_custom_call.1} parent=55 // pred_fallthru
          _
      $region56: #{tpu_custom_call.1} parent=5 // pred_fallthru
        _
      %p386 = scmp.le.s32.totalorder 1, %s25
      %p387 = scmp.lt.s32.totalorder %s25, 3
      %p388 = pnand %p386, %p387
      %p389 = pneg %p388
      // Predicated region
      $region61: #{tpu_custom_call.1} parent=5 // pred_check
        _
      $region62: #{tpu_custom_call.1} parent=5 // pred_check_branch
        %391 = sbr.rel (%p388) target = $region64
      $region63: #{tpu_custom_call.1} parent=5 // pred_region
        %s392 = ssub.s32 %s25, 1
        %s393 = sand.u32 %s38, 1
        %s394 = scalar_lea.sflag [#allocation3], %s393
        %s395 = sand.u32 %s38, 1
        %s396 = smul.addr %s395, 16
        %s397 = scalar_lea.vmem [#allocation2], %s396
        // Predicated region
        $region65: #{tpu_custom_call.1} parent=63 // pred_check
          %p398 = pneg %p51
        $region66: #{tpu_custom_call.1} parent=63 // pred_check_branch
          %400 = sbr.rel (%p398) target = $region68
        $region67: #{tpu_custom_call.1} parent=63 // pred_region
          %401 = dma.done %s394, 256
        $region68: #{tpu_custom_call.1} parent=63 // pred_fallthru
          _
        // Predicated region
        $region69: #{tpu_custom_call.1} parent=63 // pred_check
          %p402 = pneg %p72
        $region70: #{tpu_custom_call.1} parent=63 // pred_check_branch
          %404 = sbr.rel (%p402) target = $region72
        $region71: #{tpu_custom_call.1} parent=63 // pred_region
          %405 = dma.done [#allocation6], 2048
        $region72: #{tpu_custom_call.1} parent=63 // pred_fallthru
          _
        // Predicated region
        $region73: #{tpu_custom_call.1} parent=63 // pred_check
          %p406 = pneg %p114
        $region74: #{tpu_custom_call.1} parent=63 // pred_check_branch
          %408 = sbr.rel (%p406) target = $region76
        $region75: #{tpu_custom_call.1} parent=63 // pred_region
          %409 = dma.done [#allocation6], 2048
        $region76: #{tpu_custom_call.1} parent=63 // pred_fallthru
          _
        // Predicated region
        $region77: #{tpu_custom_call.1} parent=63 // pred_check
          %p410 = pneg %p156
        $region78: #{tpu_custom_call.1} parent=63 // pred_check_branch
          %412 = sbr.rel (%p410) target = $region80
        $region79: #{tpu_custom_call.1} parent=63 // pred_region
          %413 = dma.done [#allocation9], 2048
        $region80: #{tpu_custom_call.1} parent=63 // pred_fallthru
          _
        %s414 = sand.u32 %s38, 1
        %s415 = scalar_lea.sflag [#allocation3], %s414
        %s416 = sand.u32 %s38, 1
        %s417 = smul.addr %s416, 16
        %s418 = scalar_lea.vmem [#allocation2], %s417
        %p419 = pneg %p51
        %p420 = pneg %p48
        %p421 = pneg %p72
        %p422 = pneg %p69
        %p423 = pneg %p93
        %p424 = pneg %p90
        %p425 = pneg %p114
        %p426 = pneg %p111
        %p427 = pneg %p135
        %p428 = pneg %p132
        %p429 = pneg %p156
        %p430 = pneg %p153
        %p431 = pneg %p177
        %p432 = pneg %p174
        %p433 = pneg %p198
        %p434 = pneg %p195
        %p435 = pneg %p219
        %p436 = pneg %p216
        %p437 = pneg %p240
        %p438 = pneg %p237
        %p439 = pneg %p261
        %p440 = pneg %p258
        %p441 = pneg %p287
        %p442 = pneg %p284
        %s443 = sand.u32 %s274, 1
        %s444 = scalar_lea.sflag [#allocation4], %s443
        %s445 = sand.u32 %s274, 1
        %s446 = smul.addr %s445, 16
        %s447 = scalar_lea.vmem [#allocation10], %s446
        %v448 = vld [vmem:[%s397] sm:$0xff]
        %v449 = vld [vmem:[%s397 + $0x8] sm:$0xff]
        %450 = vadd.xlane.f32.xlu0 %v448
        %v451 = vpop.xlane.xlu0 %450
        %452 = vadd.xlane.f32.xlu0 %v449
        %v453 = vpop.xlane.xlu0 %452
        %v454 = vrcp.pop 128.0
        %v455 = vmul.f32 %v451, %v454
        %v456 = vmul.f32 %v453, %v454
        %v457 = vsub.f32 %v448, %v455
        %v458 = vsub.f32 %v449, %v456
        %v459 = vmul.f32 %v457, %v457
        %v460 = vmul.f32 %v458, %v458
        %461 = vadd.xlane.f32.xlu0 %v459
        %v462 = vpop.xlane.xlu0 %461
        %463 = vadd.xlane.f32.xlu0 %v460
        %v464 = vpop.xlane.xlu0 %463
        %v465 = vmul.f32 %v462, %v454
        %v466 = vmul.f32 %v464, %v454
        %v467 = vadd.f32 %v465, 1e-05
        %v468 = vadd.f32 %v466, 1e-05
        %v469 = vrsqrt.pop %v467
        %v470 = vrsqrt.pop %v468
        %v471 = vmul.f32 %v457, %v469
        %v472 = vmul.f32 %v458, %v470
        %v473 = vld [vmem:[%s7] sm:$0x1]
        %v475 = vlaneseq
        %v476 = vshrl.u32 %v475, 7
        %v477 = vsub.s32 0, %v476
        %v478 = vrot.slane %v473, %v477
        %v480 = vmul.f32 %v471, %v478
        %v481 = vmul.f32 %v472, %v478
        %v482 = vld [vmem:[%s8] sm:$0x1]
        %v484 = vlaneseq
        %v485 = vshrl.u32 %v484, 7
        %v486 = vsub.s32 0, %v485
        %v487 = vrot.slane %v482, %v486
        %v489 = vadd.f32 %v480, %v487
        %v490 = vadd.f32 %v481, %v487
        %v491 = vld [vmem:[%s9] sm:$0x1]
        %v493 = vlaneseq
        %v494 = vshrl.u32 %v493, 7
        %v495 = vsub.s32 0, %v494
        %v496 = vrot.slane %v491, %v495
        %v498 = vmul.f32 %v471, %v496
        %v499 = vmul.f32 %v472, %v496
        %v500 = vld [vmem:[%s10] sm:$0x1]
        %v502 = vlaneseq
        %v503 = vshrl.u32 %v502, 7
        %v504 = vsub.s32 0, %v503
        %v505 = vrot.slane %v500, %v504
        %v507 = vadd.f32 %v498, %v505
        %v508 = vadd.f32 %v499, %v505
        %v509 = vld [vmem:[#allocation5] sm:$0xff]
        %v510 = vld [vmem:[#allocation5 + $0x8] sm:$0xff]
        %v511 = vld [vmem:[#allocation5 + $0x10] sm:$0xff]
        %v512 = vld [vmem:[#allocation5 + $0x18] sm:$0xff]
        %v513 = vld [vmem:[#allocation5 + $0x20] sm:$0xff]
        %v514 = vld [vmem:[#allocation5 + $0x28] sm:$0xff]
        %v515 = vld [vmem:[#allocation5 + $0x30] sm:$0xff]
        %v516 = vld [vmem:[#allocation5 + $0x38] sm:$0xff]
        %v517 = vld [vmem:[#allocation5 + $0x40] sm:$0xff]
        %v518 = vld [vmem:[#allocation5 + $0x48] sm:$0xff]
        %v519 = vld [vmem:[#allocation5 + $0x50] sm:$0xff]
        %v520 = vld [vmem:[#allocation5 + $0x58] sm:$0xff]
        %v521 = vld [vmem:[#allocation5 + $0x60] sm:$0xff]
        %v522 = vld [vmem:[#allocation5 + $0x68] sm:$0xff]
        %v523 = vld [vmem:[#allocation5 + $0x70] sm:$0xff]
        %v524 = vld [vmem:[#allocation5 + $0x78] sm:$0xff]
        %v525 = vld [vmem:[%s2] sm:$0x1]
        %v527 = vlaneseq
        %v528 = vshrl.u32 %v527, 7
        %v529 = vsub.s32 0, %v528
        %v530 = vrot.slane %v525, %v529
        %532 = vmatprep.subr.mxu0 0.0
        %533 = vmatpush1.msra.mxu0 %v524
        %534 = vmatprep.subr.mxu0 0.0
        %535 = vmatpush1.msra.mxu0 %v523
        %536 = vmatprep.subr.mxu0 0.0
        %537 = vmatpush1.msra.mxu0 %v522
        %538 = vmatprep.subr.mxu0 0.0
        %539 = vmatpush1.msra.mxu0 %v521
        %540 = vmatprep.subr.mxu0 0.0
        %541 = vmatpush1.msra.mxu0 %v520
        %542 = vmatprep.subr.mxu0 0.0
        %543 = vmatpush1.msra.mxu0 %v519
        %544 = vmatprep.subr.mxu0 0.0
        %545 = vmatpush1.msra.mxu0 %v518
        %546 = vmatprep.subr.mxu0 0.0
        %547 = vmatpush1.msra.mxu0 %v517
        %548 = vmatprep.subr.mxu0 0.0
        %549 = vmatpush1.msra.mxu0 %v516
        %550 = vmatprep.subr.mxu0 0.0
        %551 = vmatpush1.msra.mxu0 %v515
        %552 = vmatprep.subr.mxu0 0.0
        %553 = vmatpush1.msra.mxu0 %v514
        %554 = vmatprep.subr.mxu0 0.0
        %555 = vmatpush1.msra.mxu0 %v513
        %556 = vmatprep.subr.mxu0 0.0
        %557 = vmatpush1.msra.mxu0 %v512
        %558 = vmatprep.subr.mxu0 0.0
        %559 = vmatpush1.msra.mxu0 %v511
        %560 = vmatprep.subr.mxu0 0.0
        %561 = vmatpush1.msra.mxu0 %v510
        %562 = vmatprep.subr.mxu0 0.0
        %563 = vmatpush1.msra.mxu0 %v509
        %564 = vmatprep.subr.mxu0 0.0
        %565 = vmatpush2.msra.mxu0 0.0
        %566 = vmatprep.subr.mxu0 0.0
        %567 = vmatpush2.msra.mxu0 0.0
        %568 = vmatprep.subr.mxu0 0.0
        %569 = vmatpush2.msra.mxu0 0.0
        %570 = vmatprep.subr.mxu0 0.0
        %571 = vmatpush2.msra.mxu0 0.0
        %572 = vmatprep.subr.mxu0 0.0
        %573 = vmatpush2.msra.mxu0 0.0
        %574 = vmatprep.subr.mxu0 0.0
        %575 = vmatpush2.msra.mxu0 0.0
        %576 = vmatprep.subr.mxu0 0.0
        %577 = vmatpush2.msra.mxu0 0.0
        %578 = vmatprep.subr.mxu0 0.0
        %579 = vmatpush2.msra.mxu0 0.0
        %580 = vmatprep.subr.mxu0 0.0
        %581 = vmatpush2.msra.mxu0 0.0
        %582 = vmatprep.subr.mxu0 0.0
        %583 = vmatpush2.msra.mxu0 0.0
        %584 = vmatprep.subr.mxu0 0.0
        %585 = vmatpush2.msra.mxu0 0.0
        %586 = vmatprep.subr.mxu0 0.0
        %587 = vmatpush2.msra.mxu0 0.0
        %588 = vmatprep.subr.mxu0 0.0
        %589 = vmatpush2.msra.mxu0 0.0
        %590 = vmatprep.subr.mxu0 0.0
        %591 = vmatpush2.msra.mxu0 0.0
        %592 = vmatprep.subr.mxu0 0.0
        %593 = vmatpush2.msra.mxu0 0.0
        %594 = vmatprep.subr.mxu0 0.0
        %595 = vmatpush2.msra.mxu0 0.0
        %596 = vmatprep.mubr.f32.mxu0 0.0
        %597 = vmatmul.mubr.f32.gmra.mxu0 %v489
        %v598 = vpop.f32.mrf.mxu0
        %v599 = vadd.f32 %v530, %v598
        %v600 = vpop.f32.mrf.mxu0
        %601 = vmatprep.mubr.f32.mxu0 0.0
        %602 = vmatmul.mubr.f32.gmra.mxu0 %v490
        %v603 = vpop.f32.mrf.mxu0
        %v604 = vadd.f32 %v530, %v603
        %v605 = vpop.f32.mrf.mxu0
        %606 = vdwg.mxu0
        %v607 = vld [vmem:[#allocation7] sm:$0xff]
        %v608 = vld [vmem:[#allocation7 + $0x8] sm:$0xff]
        %v609 = vld [vmem:[#allocation7 + $0x10] sm:$0xff]
        %v610 = vld [vmem:[#allocation7 + $0x18] sm:$0xff]
        %v611 = vld [vmem:[#allocation7 + $0x20] sm:$0xff]
        %v612 = vld [vmem:[#allocation7 + $0x28] sm:$0xff]
        %v613 = vld [vmem:[#allocation7 + $0x30] sm:$0xff]
        %v614 = vld [vmem:[#allocation7 + $0x38] sm:$0xff]
        %v615 = vld [vmem:[#allocation7 + $0x40] sm:$0xff]
        %v616 = vld [vmem:[#allocation7 + $0x48] sm:$0xff]
        %v617 = vld [vmem:[#allocation7 + $0x50] sm:$0xff]
        %v618 = vld [vmem:[#allocation7 + $0x58] sm:$0xff]
        %v619 = vld [vmem:[#allocation7 + $0x60] sm:$0xff]
        %v620 = vld [vmem:[#allocation7 + $0x68] sm:$0xff]
        %v621 = vld [vmem:[#allocation7 + $0x70] sm:$0xff]
        %v622 = vld [vmem:[#allocation7 + $0x78] sm:$0xff]
        %v623 = vld [vmem:[%s4] sm:$0x1]
        %v625 = vlaneseq
        %v626 = vshrl.u32 %v625, 7
        %v627 = vsub.s32 0, %v626
        %v628 = vrot.slane %v623, %v627
        %630 = vmatprep.subr.mxu0 0.0
        %631 = vmatpush1.msra.mxu0 %v622
        %632 = vmatprep.subr.mxu0 0.0
        %633 = vmatpush1.msra.mxu0 %v621
        %634 = vmatprep.subr.mxu0 0.0
        %635 = vmatpush1.msra.mxu0 %v620
        %636 = vmatprep.subr.mxu0 0.0
        %637 = vmatpush1.msra.mxu0 %v619
        %638 = vmatprep.subr.mxu0 0.0
        %639 = vmatpush1.msra.mxu0 %v618
        %640 = vmatprep.subr.mxu0 0.0
        %641 = vmatpush1.msra.mxu0 %v617
        %642 = vmatprep.subr.mxu0 0.0
        %643 = vmatpush1.msra.mxu0 %v616
        %644 = vmatprep.subr.mxu0 0.0
        %645 = vmatpush1.msra.mxu0 %v615
        %646 = vmatprep.subr.mxu0 0.0
        %647 = vmatpush1.msra.mxu0 %v614
        %648 = vmatprep.subr.mxu0 0.0
        %649 = vmatpush1.msra.mxu0 %v613
        %650 = vmatprep.subr.mxu0 0.0
        %651 = vmatpush1.msra.mxu0 %v612
        %652 = vmatprep.subr.mxu0 0.0
        %653 = vmatpush1.msra.mxu0 %v611
        %654 = vmatprep.subr.mxu0 0.0
        %655 = vmatpush1.msra.mxu0 %v610
        %656 = vmatprep.subr.mxu0 0.0
        %657 = vmatpush1.msra.mxu0 %v609
        %658 = vmatprep.subr.mxu0 0.0
        %659 = vmatpush1.msra.mxu0 %v608
        %660 = vmatprep.subr.mxu0 0.0
        %661 = vmatpush1.msra.mxu0 %v607
        %662 = vmatprep.subr.mxu0 0.0
        %663 = vmatpush2.msra.mxu0 0.0
        %664 = vmatprep.subr.mxu0 0.0
        %665 = vmatpush2.msra.mxu0 0.0
        %666 = vmatprep.subr.mxu0 0.0
        %667 = vmatpush2.msra.mxu0 0.0
        %668 = vmatprep.subr.mxu0 0.0
        %669 = vmatpush2.msra.mxu0 0.0
        %670 = vmatprep.subr.mxu0 0.0
        %671 = vmatpush2.msra.mxu0 0.0
        %672 = vmatprep.subr.mxu0 0.0
        %673 = vmatpush2.msra.mxu0 0.0
        %674 = vmatprep.subr.mxu0 0.0
        %675 = vmatpush2.msra.mxu0 0.0
        %676 = vmatprep.subr.mxu0 0.0
        %677 = vmatpush2.msra.mxu0 0.0
        %678 = vmatprep.subr.mxu0 0.0
        %679 = vmatpush2.msra.mxu0 0.0
        %680 = vmatprep.subr.mxu0 0.0
        %681 = vmatpush2.msra.mxu0 0.0
        %682 = vmatprep.subr.mxu0 0.0
        %683 = vmatpush2.msra.mxu0 0.0
        %684 = vmatprep.subr.mxu0 0.0
        %685 = vmatpush2.msra.mxu0 0.0
        %686 = vmatprep.subr.mxu0 0.0
        %687 = vmatpush2.msra.mxu0 0.0
        %688 = vmatprep.subr.mxu0 0.0
        %689 = vmatpush2.msra.mxu0 0.0
        %690 = vmatprep.subr.mxu0 0.0
        %691 = vmatpush2.msra.mxu0 0.0
        %692 = vmatprep.subr.mxu0 0.0
        %693 = vmatpush2.msra.mxu0 0.0
        %694 = vmatprep.mubr.f32.mxu0 0.0
        %695 = vmatmul.mubr.f32.gmra.mxu0 %v507
        %v696 = vpop.f32.mrf.mxu0
        %v697 = vadd.f32 %v628, %v696
        %v698 = vpop.f32.mrf.mxu0
        %699 = vmatprep.mubr.f32.mxu0 0.0
        %700 = vmatmul.mubr.f32.gmra.mxu0 %v508
        %v701 = vpop.f32.mrf.mxu0
        %v702 = vadd.f32 %v628, %v701
        %v703 = vpop.f32.mrf.mxu0
        %704 = vdwg.mxu0
        %v705 = vld [vmem:[#allocation8] sm:$0xff]
        %v706 = vld [vmem:[#allocation8 + $0x8] sm:$0xff]
        %v707 = vld [vmem:[#allocation8 + $0x10] sm:$0xff]
        %v708 = vld [vmem:[#allocation8 + $0x18] sm:$0xff]
        %v709 = vld [vmem:[#allocation8 + $0x20] sm:$0xff]
        %v710 = vld [vmem:[#allocation8 + $0x28] sm:$0xff]
        %v711 = vld [vmem:[#allocation8 + $0x30] sm:$0xff]
        %v712 = vld [vmem:[#allocation8 + $0x38] sm:$0xff]
        %v713 = vld [vmem:[#allocation8 + $0x40] sm:$0xff]
        %v714 = vld [vmem:[#allocation8 + $0x48] sm:$0xff]
        %v715 = vld [vmem:[#allocation8 + $0x50] sm:$0xff]
        %v716 = vld [vmem:[#allocation8 + $0x58] sm:$0xff]
        %v717 = vld [vmem:[#allocation8 + $0x60] sm:$0xff]
        %v718 = vld [vmem:[#allocation8 + $0x68] sm:$0xff]
        %v719 = vld [vmem:[#allocation8 + $0x70] sm:$0xff]
        %v720 = vld [vmem:[#allocation8 + $0x78] sm:$0xff]
        %v721 = vld [vmem:[%s6] sm:$0x1]
        %v723 = vlaneseq
        %v724 = vshrl.u32 %v723, 7
        %v725 = vsub.s32 0, %v724
        %v726 = vrot.slane %v721, %v725
        %728 = vmatprep.subr.mxu0 0.0
        %729 = vmatpush1.msra.mxu0 %v720
        %730 = vmatprep.subr.mxu0 0.0
        %731 = vmatpush1.msra.mxu0 %v719
        %732 = vmatprep.subr.mxu0 0.0
        %733 = vmatpush1.msra.mxu0 %v718
        %734 = vmatprep.subr.mxu0 0.0
        %735 = vmatpush1.msra.mxu0 %v717
        %736 = vmatprep.subr.mxu0 0.0
        %737 = vmatpush1.msra.mxu0 %v716
        %738 = vmatprep.subr.mxu0 0.0
        %739 = vmatpush1.msra.mxu0 %v715
        %740 = vmatprep.subr.mxu0 0.0
        %741 = vmatpush1.msra.mxu0 %v714
        %742 = vmatprep.subr.mxu0 0.0
        %743 = vmatpush1.msra.mxu0 %v713
        %744 = vmatprep.subr.mxu0 0.0
        %745 = vmatpush1.msra.mxu0 %v712
        %746 = vmatprep.subr.mxu0 0.0
        %747 = vmatpush1.msra.mxu0 %v711
        %748 = vmatprep.subr.mxu0 0.0
        %749 = vmatpush1.msra.mxu0 %v710
        %750 = vmatprep.subr.mxu0 0.0
        %751 = vmatpush1.msra.mxu0 %v709
        %752 = vmatprep.subr.mxu0 0.0
        %753 = vmatpush1.msra.mxu0 %v708
        %754 = vmatprep.subr.mxu0 0.0
        %755 = vmatpush1.msra.mxu0 %v707
        %756 = vmatprep.subr.mxu0 0.0
        %757 = vmatpush1.msra.mxu0 %v706
        %758 = vmatprep.subr.mxu0 0.0
        %759 = vmatpush1.msra.mxu0 %v705
        %760 = vmatprep.subr.mxu0 0.0
        %761 = vmatpush2.msra.mxu0 0.0
        %762 = vmatprep.subr.mxu0 0.0
        %763 = vmatpush2.msra.mxu0 0.0
        %764 = vmatprep.subr.mxu0 0.0
        %765 = vmatpush2.msra.mxu0 0.0
        %766 = vmatprep.subr.mxu0 0.0
        %767 = vmatpush2.msra.mxu0 0.0
        %768 = vmatprep.subr.mxu0 0.0
        %769 = vmatpush2.msra.mxu0 0.0
        %770 = vmatprep.subr.mxu0 0.0
        %771 = vmatpush2.msra.mxu0 0.0
        %772 = vmatprep.subr.mxu0 0.0
        %773 = vmatpush2.msra.mxu0 0.0
        %774 = vmatprep.subr.mxu0 0.0
        %775 = vmatpush2.msra.mxu0 0.0
        %776 = vmatprep.subr.mxu0 0.0
        %777 = vmatpush2.msra.mxu0 0.0
        %778 = vmatprep.subr.mxu0 0.0
        %779 = vmatpush2.msra.mxu0 0.0
        %780 = vmatprep.subr.mxu0 0.0
        %781 = vmatpush2.msra.mxu0 0.0
        %782 = vmatprep.subr.mxu0 0.0
        %783 = vmatpush2.msra.mxu0 0.0
        %784 = vmatprep.subr.mxu0 0.0
        %785 = vmatpush2.msra.mxu0 0.0
        %786 = vmatprep.subr.mxu0 0.0
        %787 = vmatpush2.msra.mxu0 0.0
        %788 = vmatprep.subr.mxu0 0.0
        %789 = vmatpush2.msra.mxu0 0.0
        %790 = vmatprep.subr.mxu0 0.0
        %791 = vmatpush2.msra.mxu0 0.0
        %792 = vmatprep.mubr.f32.mxu0 0.0
        %793 = vmatmul.mubr.f32.gmra.mxu0 %v507
        %v794 = vpop.f32.mrf.mxu0
        %v795 = vadd.f32 %v726, %v794
        %v796 = vpop.f32.mrf.mxu0
        %797 = vmatprep.mubr.f32.mxu0 0.0
        %798 = vmatmul.mubr.f32.gmra.mxu0 %v508
        %v799 = vpop.f32.mrf.mxu0
        %v800 = vadd.f32 %v726, %v799
        %v801 = vpop.f32.mrf.mxu0
        %802 = vdwg.mxu0
        %v803 = vmax.f32 %v697, %v702
        %v804 = vrot.slane %v803, 4
        %v805 = vmax.f32 %v803, %v804
        %v806 = vrot.slane %v805, 2
        %v807 = vmax.f32 %v805, %v806
        %v808 = vrot.slane %v807, 1
        %v809 = vmax.f32 %v807, %v808
        %v810 = vsub.f32 %v697, %v809
        %v811 = vsub.f32 %v702, %v809
        %v812 = vmul.f32 %v810, 1.442695
        %v813 = vpow.pop %v812
        %v814 = vmul.f32 %v811, 1.442695
        %v815 = vpow.pop %v814
        %v816 = vadd.f32 %v813, %v815
        %v817 = vrot.slane %v816, 4
        %v818 = vadd.f32 %v816, %v817
        %v819 = vrot.slane %v818, 2
        %v820 = vadd.f32 %v818, %v819
        %v821 = vrot.slane %v820, 1
        %v822 = vadd.f32 %v820, %v821
        %v823 = vrcp.pop %v822
        %v824 = vmul.f32 %v813, %v823
        %v825 = vmul.f32 %v815, %v823
        %vm826 = vcmask 261120
        %v827 = vsel %vm826, %v599, -inf
        %828 = vmax.xlane.f32.xlu0 %v827
        %v829 = vpop.xlane.xlu0 %828
        %v830 = vsel %vm826, %v604, -inf
        %831 = vmax.xlane.f32.xlu0 %v830
        %v832 = vpop.xlane.xlu0 %831
        %v833 = vsub.f32 %v599, %v829
        %v834 = vsub.f32 %v604, %v832
        %v835 = vmul.f32 %v833, 1.442695
        %v836 = vpow.pop %v835
        %v837 = vmul.f32 %v834, 1.442695
        %v838 = vpow.pop %v837
        %v839 = vsel %vm826, %v836, 0.0
        %840 = vadd.xlane.f32.xlu0 %v839
        %v841 = vpop.xlane.xlu0 %840
        %v842 = vsel %vm826, %v838, 0.0
        %843 = vadd.xlane.f32.xlu0 %v842
        %v844 = vpop.xlane.xlu0 %843
        %v845 = vrcp.pop %v841
        %v846 = vmul.f32 %v836, %v845
        %v847 = vrcp.pop %v844
        %v848 = vmul.f32 %v838, %v847
        %849 = vxpose.xlu0.b32.start [1/16] %v824, 128
        %850 = vxpose.xlu0.b32.cont [2/16] %v825, 128
        %851 = vxpose.xlu0.b32.cont [3/16] 0.0, 128
        %852 = vxpose.xlu0.b32.cont [4/16] 0.0, 128
        %853 = vxpose.xlu0.b32.cont [5/16] 0.0, 128
        %854 = vxpose.xlu0.b32.cont [6/16] 0.0, 128
        %855 = vxpose.xlu0.b32.cont [7/16] 0.0, 128
        %856 = vxpose.xlu0.b32.cont [8/16] 0.0, 128
        %857 = vxpose.xlu0.b32.cont [9/16] 0.0, 128
        %858 = vxpose.xlu0.b32.cont [10/16] 0.0, 128
        %859 = vxpose.xlu0.b32.cont [11/16] 0.0, 128
        %860 = vxpose.xlu0.b32.cont [12/16] 0.0, 128
        %861 = vxpose.xlu0.b32.cont [13/16] 0.0, 128
        %862 = vxpose.xlu0.b32.cont [14/16] 0.0, 128
        %863 = vxpose.xlu0.b32.cont [15/16] 0.0, 128
        %864 = vxpose.xlu0.b32.end [16/16] 0.0, 128
        %v865 = vpop.trf.xlu0
        %v866 = vpop.trf.xlu0
        %v867 = vpop.trf.xlu0
        %v868 = vpop.trf.xlu0
        %v869 = vpop.trf.xlu0
        %v870 = vpop.trf.xlu0
        %v871 = vpop.trf.xlu0
        %v872 = vpop.trf.xlu0
        %v873 = vpop.trf.xlu0
        %v874 = vpop.trf.xlu0
        %v875 = vpop.trf.xlu0
        %v876 = vpop.trf.xlu0
        %v877 = vpop.trf.xlu0
        %v878 = vpop.trf.xlu0
        %v879 = vpop.trf.xlu0
        %v880 = vpop.trf.xlu0
        %vm881 = vcmask 130048
        %v883 = vsel %vm881, %v865, 0
        %v886 = vsel %vm881, %v866, 0
        %v889 = vsel %vm881, %v867, 0
        %v892 = vsel %vm881, %v868, 0
        %894 = vmatprep.subr.mxu0 0.0
        %895 = vmatpush1.msra.mxu0 0.0
        %896 = vmatprep.subr.mxu0 0.0
        %897 = vmatpush1.msra.mxu0 0.0
        %898 = vmatprep.subr.mxu0 0.0
        %899 = vmatpush1.msra.mxu0 0.0
        %900 = vmatprep.subr.mxu0 0.0
        %901 = vmatpush1.msra.mxu0 0.0
        %902 = vmatprep.subr.mxu0 0.0
        %903 = vmatpush1.msra.mxu0 0.0
        %904 = vmatprep.subr.mxu0 0.0
        %905 = vmatpush1.msra.mxu0 0.0
        %906 = vmatprep.subr.mxu0 0.0
        %907 = vmatpush1.msra.mxu0 0.0
        %908 = vmatprep.subr.mxu0 0.0
        %909 = vmatpush1.msra.mxu0 0.0
        %910 = vmatprep.subr.mxu0 0.0
        %911 = vmatpush1.msra.mxu0 0.0
        %912 = vmatprep.subr.mxu0 0.0
        %913 = vmatpush1.msra.mxu0 0.0
        %914 = vmatprep.subr.mxu0 0.0
        %915 = vmatpush1.msra.mxu0 0.0
        %916 = vmatprep.subr.mxu0 0.0
        %917 = vmatpush1.msra.mxu0 0.0
        %918 = vmatprep.subr.mxu0 0.0
        %919 = vmatpush1.msra.mxu0 0.0
        %920 = vmatprep.subr.mxu0 0.0
        %921 = vmatpush1.msra.mxu0 0.0
        %922 = vmatprep.subr.mxu0 0.0
        %923 = vmatpush1.msra.mxu0 %v800
        %924 = vmatprep.subr.mxu0 0.0
        %925 = vmatpush1.msra.mxu0 %v795
        %926 = vmatprep.subr.mxu0 0.0
        %927 = vmatpush2.msra.mxu0 0.0
        %928 = vmatprep.subr.mxu0 0.0
        %929 = vmatpush2.msra.mxu0 0.0
        %930 = vmatprep.subr.mxu0 0.0
        %931 = vmatpush2.msra.mxu0 0.0
        %932 = vmatprep.subr.mxu0 0.0
        %933 = vmatpush2.msra.mxu0 0.0
        %934 = vmatprep.subr.mxu0 0.0
        %935 = vmatpush2.msra.mxu0 0.0
        %936 = vmatprep.subr.mxu0 0.0
        %937 = vmatpush2.msra.mxu0 0.0
        %938 = vmatprep.subr.mxu0 0.0
        %939 = vmatpush2.msra.mxu0 0.0
        %940 = vmatprep.subr.mxu0 0.0
        %941 = vmatpush2.msra.mxu0 0.0
        %942 = vmatprep.subr.mxu0 0.0
        %943 = vmatpush2.msra.mxu0 0.0
        %944 = vmatprep.subr.mxu0 0.0
        %945 = vmatpush2.msra.mxu0 0.0
        %946 = vmatprep.subr.mxu0 0.0
        %947 = vmatpush2.msra.mxu0 0.0
        %948 = vmatprep.subr.mxu0 0.0
        %949 = vmatpush2.msra.mxu0 0.0
        %950 = vmatprep.subr.mxu0 0.0
        %951 = vmatpush2.msra.mxu0 0.0
        %952 = vmatprep.subr.mxu0 0.0
        %953 = vmatpush2.msra.mxu0 0.0
        %954 = vmatprep.subr.mxu0 0.0
        %955 = vmatpush2.msra.mxu0 0.0
        %956 = vmatprep.subr.mxu0 0.0
        %957 = vmatpush2.msra.mxu0 0.0
        %958 = vmatprep.mubr.f32.mxu0 0.0
        %959 = vmatmul.mubr.f32.gmra.mxu0 %v883
        %v960 = vpop.f32.mrf.mxu0
        %v961 = vadd.f32 0.0, %v960
        %v962 = vpop.f32.mrf.mxu0
        %963 = vmatprep.mubr.f32.mxu0 0.0
        %964 = vmatmul.mubr.f32.gmra.mxu0 %v886
        %v965 = vpop.f32.mrf.mxu0
        %v966 = vadd.f32 0.0, %v965
        %v967 = vpop.f32.mrf.mxu0
        %968 = vmatprep.mubr.f32.mxu0 0.0
        %969 = vmatmul.mubr.f32.gmra.mxu0 %v889
        %v970 = vpop.f32.mrf.mxu0
        %v971 = vadd.f32 0.0, %v970
        %v972 = vpop.f32.mrf.mxu0
        %973 = vmatprep.mubr.f32.mxu0 0.0
        %974 = vmatmul.mubr.f32.gmra.mxu0 %v892
        %v975 = vpop.f32.mrf.mxu0
        %v976 = vadd.f32 0.0, %v975
        %v977 = vpop.f32.mrf.mxu0
        %978 = vdwg.mxu0
        %v980 = vsel %vm826, %v846, 0
        %v983 = vsel %vm826, %v848, 0
        %985 = vmatprep.subr.mxu0 0.0
        %986 = vmatpush1.msra.mxu0 0.0
        %987 = vmatprep.subr.mxu0 0.0
        %988 = vmatpush1.msra.mxu0 0.0
        %989 = vmatprep.subr.mxu0 0.0
        %990 = vmatpush1.msra.mxu0 0.0
        %991 = vmatprep.subr.mxu0 0.0
        %992 = vmatpush1.msra.mxu0 0.0
        %993 = vmatprep.subr.mxu0 0.0
        %994 = vmatpush1.msra.mxu0 0.0
        %995 = vmatprep.subr.mxu0 0.0
        %996 = vmatpush1.msra.mxu0 0.0
        %997 = vmatprep.subr.mxu0 0.0
        %998 = vmatpush1.msra.mxu0 0.0
        %999 = vmatprep.subr.mxu0 0.0
        %1000 = vmatpush1.msra.mxu0 0.0
        %1001 = vmatprep.subr.mxu0 0.0
        %1002 = vmatpush1.msra.mxu0 0.0
        %1003 = vmatprep.subr.mxu0 0.0
        %1004 = vmatpush1.msra.mxu0 0.0
        %1005 = vmatprep.subr.mxu0 0.0
        %1006 = vmatpush1.msra.mxu0 0.0
        %1007 = vmatprep.subr.mxu0 0.0
        %1008 = vmatpush1.msra.mxu0 0.0
        %1009 = vmatprep.subr.mxu0 0.0
        %1010 = vmatpush1.msra.mxu0 %v976
        %1011 = vmatprep.subr.mxu0 0.0
        %1012 = vmatpush1.msra.mxu0 %v971
        %1013 = vmatprep.subr.mxu0 0.0
        %1014 = vmatpush1.msra.mxu0 %v966
        %1015 = vmatprep.subr.mxu0 0.0
        %1016 = vmatpush1.msra.mxu0 %v961
        %1017 = vmatprep.subr.mxu0 0.0
        %1018 = vmatpush2.msra.mxu0 0.0
        %1019 = vmatprep.subr.mxu0 0.0
        %1020 = vmatpush2.msra.mxu0 0.0
        %1021 = vmatprep.subr.mxu0 0.0
        %1022 = vmatpush2.msra.mxu0 0.0
        %1023 = vmatprep.subr.mxu0 0.0
        %1024 = vmatpush2.msra.mxu0 0.0
        %1025 = vmatprep.subr.mxu0 0.0
        %1026 = vmatpush2.msra.mxu0 0.0
        %1027 = vmatprep.subr.mxu0 0.0
        %1028 = vmatpush2.msra.mxu0 0.0
        %1029 = vmatprep.subr.mxu0 0.0
        %1030 = vmatpush2.msra.mxu0 0.0
        %1031 = vmatprep.subr.mxu0 0.0
        %1032 = vmatpush2.msra.mxu0 0.0
        %1033 = vmatprep.subr.mxu0 0.0
        %1034 = vmatpush2.msra.mxu0 0.0
        %1035 = vmatprep.subr.mxu0 0.0
        %1036 = vmatpush2.msra.mxu0 0.0
        %1037 = vmatprep.subr.mxu0 0.0
        %1038 = vmatpush2.msra.mxu0 0.0
        %1039 = vmatprep.subr.mxu0 0.0
        %1040 = vmatpush2.msra.mxu0 0.0
        %1041 = vmatprep.subr.mxu0 0.0
        %1042 = vmatpush2.msra.mxu0 0.0
        %1043 = vmatprep.subr.mxu0 0.0
        %1044 = vmatpush2.msra.mxu0 0.0
        %1045 = vmatprep.subr.mxu0 0.0
        %1046 = vmatpush2.msra.mxu0 0.0
        %1047 = vmatprep.subr.mxu0 0.0
        %1048 = vmatpush2.msra.mxu0 0.0
        %1049 = vmatprep.mubr.f32.mxu0 0.0
        %1050 = vmatmul.mubr.f32.gmra.mxu0 %v980
        %v1051 = vpop.f32.mrf.mxu0
        %v1052 = vadd.f32 0.0, %v1051
        %v1053 = vpop.f32.mrf.mxu0
        %1054 = vmatprep.mubr.f32.mxu0 0.0
        %1055 = vmatmul.mubr.f32.gmra.mxu0 %v983
        %v1056 = vpop.f32.mrf.mxu0
        %v1057 = vadd.f32 0.0, %v1056
        %v1058 = vpop.f32.mrf.mxu0
        %1059 = vdwg.mxu0
        %1060 = vst.msk [vmem:[%s447] sm:$0xff] %vm826, %v1052
        %1061 = vst.msk [vmem:[%s447 + $0x8] sm:$0xff] %vm826, %v1057
        %vm1062 = vcmask 523520
        %v1063 = vsel %vm1062, %v599, -inf
        %1064 = vmax.xlane.f32.xlu0 %v1063
        %v1065 = vpop.xlane.xlu0 %1064
        %v1066 = vsel %vm1062, %v604, -inf
        %1067 = vmax.xlane.f32.xlu0 %v1066
        %v1068 = vpop.xlane.xlu0 %1067
        %v1069 = vsub.f32 %v599, %v1065
        %v1070 = vsub.f32 %v604, %v1068
        %v1071 = vmul.f32 %v1069, 1.442695
        %v1072 = vpow.pop %v1071
        %v1073 = vmul.f32 %v1070, 1.442695
        %v1074 = vpow.pop %v1073
        %1077 = vrot.lane.b32.xlu0 %v1072, 96
        %v1078 = vpop.permute.xlu0 %1077
        %1079 = vrot.lane.b32.xlu0 %v1074, 96
        %v1080 = vpop.permute.xlu0 %1079
        %v1083 = vsel %vm826, %v1078, 0.0
        %1084 = vadd.xlane.f32.xlu0 %v1083
        %v1085 = vpop.xlane.xlu0 %1084
        %v1086 = vsel %vm826, %v1080, 0.0
        %1087 = vadd.xlane.f32.xlu0 %v1086
        %v1088 = vpop.xlane.xlu0 %1087
        %v1089 = vrcp.pop %v1085
        %v1090 = vmul.f32 %v1072, %v1089
        %v1091 = vrcp.pop %v1088
        %v1092 = vmul.f32 %v1074, %v1091
        %1095 = vrot.lane.b32.xlu0 %v824, 96
        %v1096 = vpop.permute.xlu0 %1095
        %1097 = vrot.lane.b32.xlu0 %v825, 96
        %v1098 = vpop.permute.xlu0 %1097
        %1101 = vxpose.xlu0.b32.start [1/16] %v1096, 128
        %1102 = vxpose.xlu0.b32.cont [2/16] %v1098, 128
        %1103 = vxpose.xlu0.b32.cont [3/16] 0.0, 128
        %1104 = vxpose.xlu0.b32.cont [4/16] 0.0, 128
        %1105 = vxpose.xlu0.b32.cont [5/16] 0.0, 128
        %1106 = vxpose.xlu0.b32.cont [6/16] 0.0, 128
        %1107 = vxpose.xlu0.b32.cont [7/16] 0.0, 128
        %1108 = vxpose.xlu0.b32.cont [8/16] 0.0, 128
        %1109 = vxpose.xlu0.b32.cont [9/16] 0.0, 128
        %1110 = vxpose.xlu0.b32.cont [10/16] 0.0, 128
        %1111 = vxpose.xlu0.b32.cont [11/16] 0.0, 128
        %1112 = vxpose.xlu0.b32.cont [12/16] 0.0, 128
        %1113 = vxpose.xlu0.b32.cont [13/16] 0.0, 128
        %1114 = vxpose.xlu0.b32.cont [14/16] 0.0, 128
        %1115 = vxpose.xlu0.b32.cont [15/16] 0.0, 128
        %1116 = vxpose.xlu0.b32.end [16/16] 0.0, 128
        %v1117 = vpop.trf.xlu0
        %v1118 = vpop.trf.xlu0
        %v1119 = vpop.trf.xlu0
        %v1120 = vpop.trf.xlu0
        %v1121 = vpop.trf.xlu0
        %v1122 = vpop.trf.xlu0
        %v1123 = vpop.trf.xlu0
        %v1124 = vpop.trf.xlu0
        %v1125 = vpop.trf.xlu0
        %v1126 = vpop.trf.xlu0
        %v1127 = vpop.trf.xlu0
        %v1128 = vpop.trf.xlu0
        %v1129 = vpop.trf.xlu0
        %v1130 = vpop.trf.xlu0
        %v1131 = vpop.trf.xlu0
        %v1132 = vpop.trf.xlu0
        %1135 = vrot.lane.b32.xlu0 %v795, 96
        %v1136 = vpop.permute.xlu0 %1135
        %1137 = vrot.lane.b32.xlu0 %v800, 96
        %v1138 = vpop.permute.xlu0 %1137
        %v1142 = vsel %vm881, %v1117, 0
        %v1145 = vsel %vm881, %v1118, 0
        %v1148 = vsel %vm881, %v1119, 0
        %v1151 = vsel %vm881, %v1120, 0
        %1153 = vmatprep.subr.mxu0 0.0
        %1154 = vmatpush1.msra.mxu0 0.0
        %1155 = vmatprep.subr.mxu0 0.0
        %1156 = vmatpush1.msra.mxu0 0.0
        %1157 = vmatprep.subr.mxu0 0.0
        %1158 = vmatpush1.msra.mxu0 0.0
        %1159 = vmatprep.subr.mxu0 0.0
        %1160 = vmatpush1.msra.mxu0 0.0
        %1161 = vmatprep.subr.mxu0 0.0
        %1162 = vmatpush1.msra.mxu0 0.0
        %1163 = vmatprep.subr.mxu0 0.0
        %1164 = vmatpush1.msra.mxu0 0.0
        %1165 = vmatprep.subr.mxu0 0.0
        %1166 = vmatpush1.msra.mxu0 0.0
        %1167 = vmatprep.subr.mxu0 0.0
        %1168 = vmatpush1.msra.mxu0 0.0
        %1169 = vmatprep.subr.mxu0 0.0
        %1170 = vmatpush1.msra.mxu0 0.0
        %1171 = vmatprep.subr.mxu0 0.0
        %1172 = vmatpush1.msra.mxu0 0.0
        %1173 = vmatprep.subr.mxu0 0.0
        %1174 = vmatpush1.msra.mxu0 0.0
        %1175 = vmatprep.subr.mxu0 0.0
        %1176 = vmatpush1.msra.mxu0 0.0
        %1177 = vmatprep.subr.mxu0 0.0
        %1178 = vmatpush1.msra.mxu0 0.0
        %1179 = vmatprep.subr.mxu0 0.0
        %1180 = vmatpush1.msra.mxu0 0.0
        %1181 = vmatprep.subr.mxu0 0.0
        %1182 = vmatpush1.msra.mxu0 %v1138
        %1183 = vmatprep.subr.mxu0 0.0
        %1184 = vmatpush1.msra.mxu0 %v1136
        %1185 = vmatprep.subr.mxu0 0.0
        %1186 = vmatpush2.msra.mxu0 0.0
        %1187 = vmatprep.subr.mxu0 0.0
        %1188 = vmatpush2.msra.mxu0 0.0
        %1189 = vmatprep.subr.mxu0 0.0
        %1190 = vmatpush2.msra.mxu0 0.0
        %1191 = vmatprep.subr.mxu0 0.0
        %1192 = vmatpush2.msra.mxu0 0.0
        %1193 = vmatprep.subr.mxu0 0.0
        %1194 = vmatpush2.msra.mxu0 0.0
        %1195 = vmatprep.subr.mxu0 0.0
        %1196 = vmatpush2.msra.mxu0 0.0
        %1197 = vmatprep.subr.mxu0 0.0
        %1198 = vmatpush2.msra.mxu0 0.0
        %1199 = vmatprep.subr.mxu0 0.0
        %1200 = vmatpush2.msra.mxu0 0.0
        %1201 = vmatprep.subr.mxu0 0.0
        %1202 = vmatpush2.msra.mxu0 0.0
        %1203 = vmatprep.subr.mxu0 0.0
        %1204 = vmatpush2.msra.mxu0 0.0
        %1205 = vmatprep.subr.mxu0 0.0
        %1206 = vmatpush2.msra.mxu0 0.0
        %1207 = vmatprep.subr.mxu0 0.0
        %1208 = vmatpush2.msra.mxu0 0.0
        %1209 = vmatprep.subr.mxu0 0.0
        %1210 = vmatpush2.msra.mxu0 0.0
        %1211 = vmatprep.subr.mxu0 0.0
        %1212 = vmatpush2.msra.mxu0 0.0
        %1213 = vmatprep.subr.mxu0 0.0
        %1214 = vmatpush2.msra.mxu0 0.0
        %1215 = vmatprep.subr.mxu0 0.0
        %1216 = vmatpush2.msra.mxu0 0.0
        %1217 = vmatprep.mubr.f32.mxu0 0.0
        %1218 = vmatmul.mubr.f32.gmra.mxu0 %v1142
        %v1219 = vpop.f32.mrf.mxu0
        %v1220 = vadd.f32 0.0, %v1219
        %v1221 = vpop.f32.mrf.mxu0
        %1222 = vmatprep.mubr.f32.mxu0 0.0
        %1223 = vmatmul.mubr.f32.gmra.mxu0 %v1145
        %v1224 = vpop.f32.mrf.mxu0
        %v1225 = vadd.f32 0.0, %v1224
        %v1226 = vpop.f32.mrf.mxu0
        %1227 = vmatprep.mubr.f32.mxu0 0.0
        %1228 = vmatmul.mubr.f32.gmra.mxu0 %v1148
        %v1229 = vpop.f32.mrf.mxu0
        %v1230 = vadd.f32 0.0, %v1229
        %v1231 = vpop.f32.mrf.mxu0
        %1232 = vmatprep.mubr.f32.mxu0 0.0
        %1233 = vmatmul.mubr.f32.gmra.mxu0 %v1151
        %v1234 = vpop.f32.mrf.mxu0
        %v1235 = vadd.f32 0.0, %v1234
        %v1236 = vpop.f32.mrf.mxu0
        %1237 = vdwg.mxu0
        %1240 = vrot.lane.b32.xlu0 %v1090, 96
        %v1241 = vpop.permute.xlu0 %1240
        %1242 = vrot.lane.b32.xlu0 %v1092, 96
        %v1243 = vpop.permute.xlu0 %1242
        %v1244 = vsel %vm826, %v1241, 0
        %v1246 = vsel %vm826, %v1243, 0
        %1248 = vmatprep.subr.mxu0 0.0
        %1249 = vmatpush1.msra.mxu0 0.0
        %1250 = vmatprep.subr.mxu0 0.0
        %1251 = vmatpush1.msra.mxu0 0.0
        %1252 = vmatprep.subr.mxu0 0.0
        %1253 = vmatpush1.msra.mxu0 0.0
        %1254 = vmatprep.subr.mxu0 0.0
        %1255 = vmatpush1.msra.mxu0 0.0
        %1256 = vmatprep.subr.mxu0 0.0
        %1257 = vmatpush1.msra.mxu0 0.0
        %1258 = vmatprep.subr.mxu0 0.0
        %1259 = vmatpush1.msra.mxu0 0.0
        %1260 = vmatprep.subr.mxu0 0.0
        %1261 = vmatpush1.msra.mxu0 0.0
        %1262 = vmatprep.subr.mxu0 0.0
        %1263 = vmatpush1.msra.mxu0 0.0
        %1264 = vmatprep.subr.mxu0 0.0
        %1265 = vmatpush1.msra.mxu0 0.0
        %1266 = vmatprep.subr.mxu0 0.0
        %1267 = vmatpush1.msra.mxu0 0.0
        %1268 = vmatprep.subr.mxu0 0.0
        %1269 = vmatpush1.msra.mxu0 0.0
        %1270 = vmatprep.subr.mxu0 0.0
        %1271 = vmatpush1.msra.mxu0 0.0
        %1272 = vmatprep.subr.mxu0 0.0
        %1273 = vmatpush1.msra.mxu0 %v1235
        %1274 = vmatprep.subr.mxu0 0.0
        %1275 = vmatpush1.msra.mxu0 %v1230
        %1276 = vmatprep.subr.mxu0 0.0
        %1277 = vmatpush1.msra.mxu0 %v1225
        %1278 = vmatprep.subr.mxu0 0.0
        %1279 = vmatpush1.msra.mxu0 %v1220
        %1280 = vmatprep.subr.mxu0 0.0
        %1281 = vmatpush2.msra.mxu0 0.0
        %1282 = vmatprep.subr.mxu0 0.0
        %1283 = vmatpush2.msra.mxu0 0.0
        %1284 = vmatprep.subr.mxu0 0.0
        %1285 = vmatpush2.msra.mxu0 0.0
        %1286 = vmatprep.subr.mxu0 0.0
        %1287 = vmatpush2.msra.mxu0 0.0
        %1288 = vmatprep.subr.mxu0 0.0
        %1289 = vmatpush2.msra.mxu0 0.0
        %1290 = vmatprep.subr.mxu0 0.0
        %1291 = vmatpush2.msra.mxu0 0.0
        %1292 = vmatprep.subr.mxu0 0.0
        %1293 = vmatpush2.msra.mxu0 0.0
        %1294 = vmatprep.subr.mxu0 0.0
        %1295 = vmatpush2.msra.mxu0 0.0
        %1296 = vmatprep.subr.mxu0 0.0
        %1297 = vmatpush2.msra.mxu0 0.0
        %1298 = vmatprep.subr.mxu0 0.0
        %1299 = vmatpush2.msra.mxu0 0.0
        %1300 = vmatprep.subr.mxu0 0.0
        %1301 = vmatpush2.msra.mxu0 0.0
        %1302 = vmatprep.subr.mxu0 0.0
        %1303 = vmatpush2.msra.mxu0 0.0
        %1304 = vmatprep.subr.mxu0 0.0
        %1305 = vmatpush2.msra.mxu0 0.0
        %1306 = vmatprep.subr.mxu0 0.0
        %1307 = vmatpush2.msra.mxu0 0.0
        %1308 = vmatprep.subr.mxu0 0.0
        %1309 = vmatpush2.msra.mxu0 0.0
        %1310 = vmatprep.subr.mxu0 0.0
        %1311 = vmatpush2.msra.mxu0 0.0
        %1312 = vmatprep.mubr.f32.mxu0 0.0
        %1313 = vmatmul.mubr.f32.gmra.mxu0 %v1244
        %v1314 = vpop.f32.mrf.mxu0
        %v1315 = vadd.f32 0.0, %v1314
        %v1316 = vpop.f32.mrf.mxu0
        %1317 = vmatprep.mubr.f32.mxu0 0.0
        %1318 = vmatmul.mubr.f32.gmra.mxu0 %v1246
        %v1319 = vpop.f32.mrf.mxu0
        %v1320 = vadd.f32 0.0, %v1319
        %v1321 = vpop.f32.mrf.mxu0
        %1322 = vdwg.mxu0
        %1325 = vrot.lane.b32.xlu0 %v1315, 32
        %v1326 = vpop.permute.xlu0 %1325
        %1327 = vrot.lane.b32.xlu0 %v1320, 32
        %v1328 = vpop.permute.xlu0 %1327
        %1331 = vst.msk [vmem:[%s447] sm:$0xff] %vm1062, %v1326
        %1332 = vst.msk [vmem:[%s447 + $0x8] sm:$0xff] %vm1062, %v1328
        %vm1333 = vcmask 785920
        %v1334 = vsel %vm1333, %v599, -inf
        %1335 = vmax.xlane.f32.xlu0 %v1334
        %v1336 = vpop.xlane.xlu0 %1335
        %v1337 = vsel %vm1333, %v604, -inf
        %1338 = vmax.xlane.f32.xlu0 %v1337
        %v1339 = vpop.xlane.xlu0 %1338
        %v1340 = vsub.f32 %v599, %v1336
        %v1341 = vsub.f32 %v604, %v1339
        %v1342 = vmul.f32 %v1340, 1.442695
        %v1343 = vpow.pop %v1342
        %v1344 = vmul.f32 %v1341, 1.442695
        %v1345 = vpow.pop %v1344
        %1348 = vrot.lane.b32.xlu0 %v1343, 64
        %v1349 = vpop.permute.xlu0 %1348
        %1350 = vrot.lane.b32.xlu0 %v1345, 64
        %v1351 = vpop.permute.xlu0 %1350
        %v1354 = vsel %vm826, %v1349, 0.0
        %1355 = vadd.xlane.f32.xlu0 %v1354
        %v1356 = vpop.xlane.xlu0 %1355
        %v1357 = vsel %vm826, %v1351, 0.0
        %1358 = vadd.xlane.f32.xlu0 %v1357
        %v1359 = vpop.xlane.xlu0 %1358
        %v1360 = vrcp.pop %v1356
        %v1361 = vmul.f32 %v1343, %v1360
        %v1362 = vrcp.pop %v1359
        %v1363 = vmul.f32 %v1345, %v1362
        %1364 = vrot.lane.b32.xlu0 %v824, 64
        %v1365 = vpop.permute.xlu0 %1364
        %1366 = vrot.lane.b32.xlu0 %v825, 64
        %v1367 = vpop.permute.xlu0 %1366
        %1370 = vxpose.xlu0.b32.start [1/16] %v1365, 128
        %1371 = vxpose.xlu0.b32.cont [2/16] %v1367, 128
        %1372 = vxpose.xlu0.b32.cont [3/16] 0.0, 128
        %1373 = vxpose.xlu0.b32.cont [4/16] 0.0, 128
        %1374 = vxpose.xlu0.b32.cont [5/16] 0.0, 128
        %1375 = vxpose.xlu0.b32.cont [6/16] 0.0, 128
        %1376 = vxpose.xlu0.b32.cont [7/16] 0.0, 128
        %1377 = vxpose.xlu0.b32.cont [8/16] 0.0, 128
        %1378 = vxpose.xlu0.b32.cont [9/16] 0.0, 128
        %1379 = vxpose.xlu0.b32.cont [10/16] 0.0, 128
        %1380 = vxpose.xlu0.b32.cont [11/16] 0.0, 128
        %1381 = vxpose.xlu0.b32.cont [12/16] 0.0, 128
        %1382 = vxpose.xlu0.b32.cont [13/16] 0.0, 128
        %1383 = vxpose.xlu0.b32.cont [14/16] 0.0, 128
        %1384 = vxpose.xlu0.b32.cont [15/16] 0.0, 128
        %1385 = vxpose.xlu0.b32.end [16/16] 0.0, 128
        %v1386 = vpop.trf.xlu0
        %v1387 = vpop.trf.xlu0
        %v1388 = vpop.trf.xlu0
        %v1389 = vpop.trf.xlu0
        %v1390 = vpop.trf.xlu0
        %v1391 = vpop.trf.xlu0
        %v1392 = vpop.trf.xlu0
        %v1393 = vpop.trf.xlu0
        %v1394 = vpop.trf.xlu0
        %v1395 = vpop.trf.xlu0
        %v1396 = vpop.trf.xlu0
        %v1397 = vpop.trf.xlu0
        %v1398 = vpop.trf.xlu0
        %v1399 = vpop.trf.xlu0
        %v1400 = vpop.trf.xlu0
        %v1401 = vpop.trf.xlu0
        %1402 = vrot.lane.b32.xlu0 %v795, 64
        %v1403 = vpop.permute.xlu0 %1402
        %1404 = vrot.lane.b32.xlu0 %v800, 64
        %v1405 = vpop.permute.xlu0 %1404
        %v1409 = vsel %vm881, %v1386, 0
        %v1412 = vsel %vm881, %v1387, 0
        %v1415 = vsel %vm881, %v1388, 0
        %v1418 = vsel %vm881, %v1389, 0
        %1420 = vmatprep.subr.mxu0 0.0
        %1421 = vmatpush1.msra.mxu0 0.0
        %1422 = vmatprep.subr.mxu0 0.0
        %1423 = vmatpush1.msra.mxu0 0.0
        %1424 = vmatprep.subr.mxu0 0.0
        %1425 = vmatpush1.msra.mxu0 0.0
        %1426 = vmatprep.subr.mxu0 0.0
        %1427 = vmatpush1.msra.mxu0 0.0
        %1428 = vmatprep.subr.mxu0 0.0
        %1429 = vmatpush1.msra.mxu0 0.0
        %1430 = vmatprep.subr.mxu0 0.0
        %1431 = vmatpush1.msra.mxu0 0.0
        %1432 = vmatprep.subr.mxu0 0.0
        %1433 = vmatpush1.msra.mxu0 0.0
        %1434 = vmatprep.subr.mxu0 0.0
        %1435 = vmatpush1.msra.mxu0 0.0
        %1436 = vmatprep.subr.mxu0 0.0
        %1437 = vmatpush1.msra.mxu0 0.0
        %1438 = vmatprep.subr.mxu0 0.0
        %1439 = vmatpush1.msra.mxu0 0.0
        %1440 = vmatprep.subr.mxu0 0.0
        %1441 = vmatpush1.msra.mxu0 0.0
        %1442 = vmatprep.subr.mxu0 0.0
        %1443 = vmatpush1.msra.mxu0 0.0
        %1444 = vmatprep.subr.mxu0 0.0
        %1445 = vmatpush1.msra.mxu0 0.0
        %1446 = vmatprep.subr.mxu0 0.0
        %1447 = vmatpush1.msra.mxu0 0.0
        %1448 = vmatprep.subr.mxu0 0.0
        %1449 = vmatpush1.msra.mxu0 %v1405
        %1450 = vmatprep.subr.mxu0 0.0
        %1451 = vmatpush1.msra.mxu0 %v1403
        %1452 = vmatprep.subr.mxu0 0.0
        %1453 = vmatpush2.msra.mxu0 0.0
        %1454 = vmatprep.subr.mxu0 0.0
        %1455 = vmatpush2.msra.mxu0 0.0
        %1456 = vmatprep.subr.mxu0 0.0
        %1457 = vmatpush2.msra.mxu0 0.0
        %1458 = vmatprep.subr.mxu0 0.0
        %1459 = vmatpush2.msra.mxu0 0.0
        %1460 = vmatprep.subr.mxu0 0.0
        %1461 = vmatpush2.msra.mxu0 0.0
        %1462 = vmatprep.subr.mxu0 0.0
        %1463 = vmatpush2.msra.mxu0 0.0
        %1464 = vmatprep.subr.mxu0 0.0
        %1465 = vmatpush2.msra.mxu0 0.0
        %1466 = vmatprep.subr.mxu0 0.0
        %1467 = vmatpush2.msra.mxu0 0.0
        %1468 = vmatprep.subr.mxu0 0.0
        %1469 = vmatpush2.msra.mxu0 0.0
        %1470 = vmatprep.subr.mxu0 0.0
        %1471 = vmatpush2.msra.mxu0 0.0
        %1472 = vmatprep.subr.mxu0 0.0
        %1473 = vmatpush2.msra.mxu0 0.0
        %1474 = vmatprep.subr.mxu0 0.0
        %1475 = vmatpush2.msra.mxu0 0.0
        %1476 = vmatprep.subr.mxu0 0.0
        %1477 = vmatpush2.msra.mxu0 0.0
        %1478 = vmatprep.subr.mxu0 0.0
        %1479 = vmatpush2.msra.mxu0 0.0
        %1480 = vmatprep.subr.mxu0 0.0
        %1481 = vmatpush2.msra.mxu0 0.0
        %1482 = vmatprep.subr.mxu0 0.0
        %1483 = vmatpush2.msra.mxu0 0.0
        %1484 = vmatprep.mubr.f32.mxu0 0.0
        %1485 = vmatmul.mubr.f32.gmra.mxu0 %v1409
        %v1486 = vpop.f32.mrf.mxu0
        %v1487 = vadd.f32 0.0, %v1486
        %v1488 = vpop.f32.mrf.mxu0
        %1489 = vmatprep.mubr.f32.mxu0 0.0
        %1490 = vmatmul.mubr.f32.gmra.mxu0 %v1412
        %v1491 = vpop.f32.mrf.mxu0
        %v1492 = vadd.f32 0.0, %v1491
        %v1493 = vpop.f32.mrf.mxu0
        %1494 = vmatprep.mubr.f32.mxu0 0.0
        %1495 = vmatmul.mubr.f32.gmra.mxu0 %v1415
        %v1496 = vpop.f32.mrf.mxu0
        %v1497 = vadd.f32 0.0, %v1496
        %v1498 = vpop.f32.mrf.mxu0
        %1499 = vmatprep.mubr.f32.mxu0 0.0
        %1500 = vmatmul.mubr.f32.gmra.mxu0 %v1418
        %v1501 = vpop.f32.mrf.mxu0
        %v1502 = vadd.f32 0.0, %v1501
        %v1503 = vpop.f32.mrf.mxu0
        %1504 = vdwg.mxu0
        %1507 = vrot.lane.b32.xlu0 %v1361, 64
        %v1508 = vpop.permute.xlu0 %1507
        %1509 = vrot.lane.b32.xlu0 %v1363, 64
        %v1510 = vpop.permute.xlu0 %1509
        %v1511 = vsel %vm826, %v1508, 0
        %v1513 = vsel %vm826, %v1510, 0
        %1515 = vmatprep.subr.mxu0 0.0
        %1516 = vmatpush1.msra.mxu0 0.0
        %1517 = vmatprep.subr.mxu0 0.0
        %1518 = vmatpush1.msra.mxu0 0.0
        %1519 = vmatprep.subr.mxu0 0.0
        %1520 = vmatpush1.msra.mxu0 0.0
        %1521 = vmatprep.subr.mxu0 0.0
        %1522 = vmatpush1.msra.mxu0 0.0
        %1523 = vmatprep.subr.mxu0 0.0
        %1524 = vmatpush1.msra.mxu0 0.0
        %1525 = vmatprep.subr.mxu0 0.0
        %1526 = vmatpush1.msra.mxu0 0.0
        %1527 = vmatprep.subr.mxu0 0.0
        %1528 = vmatpush1.msra.mxu0 0.0
        %1529 = vmatprep.subr.mxu0 0.0
        %1530 = vmatpush1.msra.mxu0 0.0
        %1531 = vmatprep.subr.mxu0 0.0
        %1532 = vmatpush1.msra.mxu0 0.0
        %1533 = vmatprep.subr.mxu0 0.0
        %1534 = vmatpush1.msra.mxu0 0.0
        %1535 = vmatprep.subr.mxu0 0.0
        %1536 = vmatpush1.msra.mxu0 0.0
        %1537 = vmatprep.subr.mxu0 0.0
        %1538 = vmatpush1.msra.mxu0 0.0
        %1539 = vmatprep.subr.mxu0 0.0
        %1540 = vmatpush1.msra.mxu0 %v1502
        %1541 = vmatprep.subr.mxu0 0.0
        %1542 = vmatpush1.msra.mxu0 %v1497
        %1543 = vmatprep.subr.mxu0 0.0
        %1544 = vmatpush1.msra.mxu0 %v1492
        %1545 = vmatprep.subr.mxu0 0.0
        %1546 = vmatpush1.msra.mxu0 %v1487
        %1547 = vmatprep.subr.mxu0 0.0
        %1548 = vmatpush2.msra.mxu0 0.0
        %1549 = vmatprep.subr.mxu0 0.0
        %1550 = vmatpush2.msra.mxu0 0.0
        %1551 = vmatprep.subr.mxu0 0.0
        %1552 = vmatpush2.msra.mxu0 0.0
        %1553 = vmatprep.subr.mxu0 0.0
        %1554 = vmatpush2.msra.mxu0 0.0
        %1555 = vmatprep.subr.mxu0 0.0
        %1556 = vmatpush2.msra.mxu0 0.0
        %1557 = vmatprep.subr.mxu0 0.0
        %1558 = vmatpush2.msra.mxu0 0.0
        %1559 = vmatprep.subr.mxu0 0.0
        %1560 = vmatpush2.msra.mxu0 0.0
        %1561 = vmatprep.subr.mxu0 0.0
        %1562 = vmatpush2.msra.mxu0 0.0
        %1563 = vmatprep.subr.mxu0 0.0
        %1564 = vmatpush2.msra.mxu0 0.0
        %1565 = vmatprep.subr.mxu0 0.0
        %1566 = vmatpush2.msra.mxu0 0.0
        %1567 = vmatprep.subr.mxu0 0.0
        %1568 = vmatpush2.msra.mxu0 0.0
        %1569 = vmatprep.subr.mxu0 0.0
        %1570 = vmatpush2.msra.mxu0 0.0
        %1571 = vmatprep.subr.mxu0 0.0
        %1572 = vmatpush2.msra.mxu0 0.0
        %1573 = vmatprep.subr.mxu0 0.0
        %1574 = vmatpush2.msra.mxu0 0.0
        %1575 = vmatprep.subr.mxu0 0.0
        %1576 = vmatpush2.msra.mxu0 0.0
        %1577 = vmatprep.subr.mxu0 0.0
        %1578 = vmatpush2.msra.mxu0 0.0
        %1579 = vmatprep.mubr.f32.mxu0 0.0
        %1580 = vmatmul.mubr.f32.gmra.mxu0 %v1511
        %v1581 = vpop.f32.mrf.mxu0
        %v1582 = vadd.f32 0.0, %v1581
        %v1583 = vpop.f32.mrf.mxu0
        %1584 = vmatprep.mubr.f32.mxu0 0.0
        %1585 = vmatmul.mubr.f32.gmra.mxu0 %v1513
        %v1586 = vpop.f32.mrf.mxu0
        %v1587 = vadd.f32 0.0, %v1586
        %v1588 = vpop.f32.mrf.mxu0
        %1589 = vdwg.mxu0
        %1592 = vrot.lane.b32.xlu0 %v1582, 64
        %v1593 = vpop.permute.xlu0 %1592
        %1594 = vrot.lane.b32.xlu0 %v1587, 64
        %v1595 = vpop.permute.xlu0 %1594
        %1598 = vst.msk [vmem:[%s447] sm:$0xff] %vm1333, %v1593
        %1599 = vst.msk [vmem:[%s447 + $0x8] sm:$0xff] %vm1333, %v1595
        %vm1600 = vcmask 1048320
        %v1601 = vsel %vm1600, %v599, -inf
        %1602 = vmax.xlane.f32.xlu0 %v1601
        %v1603 = vpop.xlane.xlu0 %1602
        %v1604 = vsel %vm1600, %v604, -inf
        %1605 = vmax.xlane.f32.xlu0 %v1604
        %v1606 = vpop.xlane.xlu0 %1605
        %v1607 = vsub.f32 %v599, %v1603
        %v1608 = vsub.f32 %v604, %v1606
        %v1609 = vmul.f32 %v1607, 1.442695
        %v1610 = vpow.pop %v1609
        %v1611 = vmul.f32 %v1608, 1.442695
        %v1612 = vpow.pop %v1611
        %1615 = vrot.lane.b32.xlu0 %v1610, 32
        %v1616 = vpop.permute.xlu0 %1615
        %1617 = vrot.lane.b32.xlu0 %v1612, 32
        %v1618 = vpop.permute.xlu0 %1617
        %v1621 = vsel %vm826, %v1616, 0.0
        %1622 = vadd.xlane.f32.xlu0 %v1621
        %v1623 = vpop.xlane.xlu0 %1622
        %v1624 = vsel %vm826, %v1618, 0.0
        %1625 = vadd.xlane.f32.xlu0 %v1624
        %v1626 = vpop.xlane.xlu0 %1625
        %v1627 = vrcp.pop %v1623
        %v1628 = vmul.f32 %v1610, %v1627
        %v1629 = vrcp.pop %v1626
        %v1630 = vmul.f32 %v1612, %v1629
        %1631 = vrot.lane.b32.xlu0 %v824, 32
        %v1632 = vpop.permute.xlu0 %1631
        %1633 = vrot.lane.b32.xlu0 %v825, 32
        %v1634 = vpop.permute.xlu0 %1633
        %1637 = vxpose.xlu0.b32.start [1/16] %v1632, 128
        %1638 = vxpose.xlu0.b32.cont [2/16] %v1634, 128
        %1639 = vxpose.xlu0.b32.cont [3/16] 0.0, 128
        %1640 = vxpose.xlu0.b32.cont [4/16] 0.0, 128
        %1641 = vxpose.xlu0.b32.cont [5/16] 0.0, 128
        %1642 = vxpose.xlu0.b32.cont [6/16] 0.0, 128
        %1643 = vxpose.xlu0.b32.cont [7/16] 0.0, 128
        %1644 = vxpose.xlu0.b32.cont [8/16] 0.0, 128
        %1645 = vxpose.xlu0.b32.cont [9/16] 0.0, 128
        %1646 = vxpose.xlu0.b32.cont [10/16] 0.0, 128
        %1647 = vxpose.xlu0.b32.cont [11/16] 0.0, 128
        %1648 = vxpose.xlu0.b32.cont [12/16] 0.0, 128
        %1649 = vxpose.xlu0.b32.cont [13/16] 0.0, 128
        %1650 = vxpose.xlu0.b32.cont [14/16] 0.0, 128
        %1651 = vxpose.xlu0.b32.cont [15/16] 0.0, 128
        %1652 = vxpose.xlu0.b32.end [16/16] 0.0, 128
        %v1653 = vpop.trf.xlu0
        %v1654 = vpop.trf.xlu0
        %v1655 = vpop.trf.xlu0
        %v1656 = vpop.trf.xlu0
        %v1657 = vpop.trf.xlu0
        %v1658 = vpop.trf.xlu0
        %v1659 = vpop.trf.xlu0
        %v1660 = vpop.trf.xlu0
        %v1661 = vpop.trf.xlu0
        %v1662 = vpop.trf.xlu0
        %v1663 = vpop.trf.xlu0
        %v1664 = vpop.trf.xlu0
        %v1665 = vpop.trf.xlu0
        %v1666 = vpop.trf.xlu0
        %v1667 = vpop.trf.xlu0
        %v1668 = vpop.trf.xlu0
        %1669 = vrot.lane.b32.xlu0 %v795, 32
        %v1670 = vpop.permute.xlu0 %1669
        %1671 = vrot.lane.b32.xlu0 %v800, 32
        %v1672 = vpop.permute.xlu0 %1671
        %v1676 = vsel %vm881, %v1653, 0
        %v1679 = vsel %vm881, %v1654, 0
        %v1682 = vsel %vm881, %v1655, 0
        %v1685 = vsel %vm881, %v1656, 0
        %1687 = vmatprep.subr.mxu0 0.0
        %1688 = vmatpush1.msra.mxu0 0.0
        %1689 = vmatprep.subr.mxu0 0.0
        %1690 = vmatpush1.msra.mxu0 0.0
        %1691 = vmatprep.subr.mxu0 0.0
        %1692 = vmatpush1.msra.mxu0 0.0
        %1693 = vmatprep.subr.mxu0 0.0
        %1694 = vmatpush1.msra.mxu0 0.0
        %1695 = vmatprep.subr.mxu0 0.0
        %1696 = vmatpush1.msra.mxu0 0.0
        %1697 = vmatprep.subr.mxu0 0.0
        %1698 = vmatpush1.msra.mxu0 0.0
        %1699 = vmatprep.subr.mxu0 0.0
        %1700 = vmatpush1.msra.mxu0 0.0
        %1701 = vmatprep.subr.mxu0 0.0
        %1702 = vmatpush1.msra.mxu0 0.0
        %1703 = vmatprep.subr.mxu0 0.0
        %1704 = vmatpush1.msra.mxu0 0.0
        %1705 = vmatprep.subr.mxu0 0.0
        %1706 = vmatpush1.msra.mxu0 0.0
        %1707 = vmatprep.subr.mxu0 0.0
        %1708 = vmatpush1.msra.mxu0 0.0
        %1709 = vmatprep.subr.mxu0 0.0
        %1710 = vmatpush1.msra.mxu0 0.0
        %1711 = vmatprep.subr.mxu0 0.0
        %1712 = vmatpush1.msra.mxu0 0.0
        %1713 = vmatprep.subr.mxu0 0.0
        %1714 = vmatpush1.msra.mxu0 0.0
        %1715 = vmatprep.subr.mxu0 0.0
        %1716 = vmatpush1.msra.mxu0 %v1672
        %1717 = vmatprep.subr.mxu0 0.0
        %1718 = vmatpush1.msra.mxu0 %v1670
        %1719 = vmatprep.subr.mxu0 0.0
        %1720 = vmatpush2.msra.mxu0 0.0
        %1721 = vmatprep.subr.mxu0 0.0
        %1722 = vmatpush2.msra.mxu0 0.0
        %1723 = vmatprep.subr.mxu0 0.0
        %1724 = vmatpush2.msra.mxu0 0.0
        %1725 = vmatprep.subr.mxu0 0.0
        %1726 = vmatpush2.msra.mxu0 0.0
        %1727 = vmatprep.subr.mxu0 0.0
        %1728 = vmatpush2.msra.mxu0 0.0
        %1729 = vmatprep.subr.mxu0 0.0
        %1730 = vmatpush2.msra.mxu0 0.0
        %1731 = vmatprep.subr.mxu0 0.0
        %1732 = vmatpush2.msra.mxu0 0.0
        %1733 = vmatprep.subr.mxu0 0.0
        %1734 = vmatpush2.msra.mxu0 0.0
        %1735 = vmatprep.subr.mxu0 0.0
        %1736 = vmatpush2.msra.mxu0 0.0
        %1737 = vmatprep.subr.mxu0 0.0
        %1738 = vmatpush2.msra.mxu0 0.0
        %1739 = vmatprep.subr.mxu0 0.0
        %1740 = vmatpush2.msra.mxu0 0.0
        %1741 = vmatprep.subr.mxu0 0.0
        %1742 = vmatpush2.msra.mxu0 0.0
        %1743 = vmatprep.subr.mxu0 0.0
        %1744 = vmatpush2.msra.mxu0 0.0
        %1745 = vmatprep.subr.mxu0 0.0
        %1746 = vmatpush2.msra.mxu0 0.0
        %1747 = vmatprep.subr.mxu0 0.0
        %1748 = vmatpush2.msra.mxu0 0.0
        %1749 = vmatprep.subr.mxu0 0.0
        %1750 = vmatpush2.msra.mxu0 0.0
        %1751 = vmatprep.mubr.f32.mxu0 0.0
        %1752 = vmatmul.mubr.f32.gmra.mxu0 %v1676
        %v1753 = vpop.f32.mrf.mxu0
        %v1754 = vadd.f32 0.0, %v1753
        %v1755 = vpop.f32.mrf.mxu0
        %1756 = vmatprep.mubr.f32.mxu0 0.0
        %1757 = vmatmul.mubr.f32.gmra.mxu0 %v1679
        %v1758 = vpop.f32.mrf.mxu0
        %v1759 = vadd.f32 0.0, %v1758
        %v1760 = vpop.f32.mrf.mxu0
        %1761 = vmatprep.mubr.f32.mxu0 0.0
        %1762 = vmatmul.mubr.f32.gmra.mxu0 %v1682
        %v1763 = vpop.f32.mrf.mxu0
        %v1764 = vadd.f32 0.0, %v1763
        %v1765 = vpop.f32.mrf.mxu0
        %1766 = vmatprep.mubr.f32.mxu0 0.0
        %1767 = vmatmul.mubr.f32.gmra.mxu0 %v1685
        %v1768 = vpop.f32.mrf.mxu0
        %v1769 = vadd.f32 0.0, %v1768
        %v1770 = vpop.f32.mrf.mxu0
        %1771 = vdwg.mxu0
        %1774 = vrot.lane.b32.xlu0 %v1628, 32
        %v1775 = vpop.permute.xlu0 %1774
        %1776 = vrot.lane.b32.xlu0 %v1630, 32
        %v1777 = vpop.permute.xlu0 %1776
        %v1778 = vsel %vm826, %v1775, 0
        %v1780 = vsel %vm826, %v1777, 0
        %1782 = vmatprep.subr.mxu0 0.0
        %1783 = vmatpush1.msra.mxu0 0.0
        %1784 = vmatprep.subr.mxu0 0.0
        %1785 = vmatpush1.msra.mxu0 0.0
        %1786 = vmatprep.subr.mxu0 0.0
        %1787 = vmatpush1.msra.mxu0 0.0
        %1788 = vmatprep.subr.mxu0 0.0
        %1789 = vmatpush1.msra.mxu0 0.0
        %1790 = vmatprep.subr.mxu0 0.0
        %1791 = vmatpush1.msra.mxu0 0.0
        %1792 = vmatprep.subr.mxu0 0.0
        %1793 = vmatpush1.msra.mxu0 0.0
        %1794 = vmatprep.subr.mxu0 0.0
        %1795 = vmatpush1.msra.mxu0 0.0
        %1796 = vmatprep.subr.mxu0 0.0
        %1797 = vmatpush1.msra.mxu0 0.0
        %1798 = vmatprep.subr.mxu0 0.0
        %1799 = vmatpush1.msra.mxu0 0.0
        %1800 = vmatprep.subr.mxu0 0.0
        %1801 = vmatpush1.msra.mxu0 0.0
        %1802 = vmatprep.subr.mxu0 0.0
        %1803 = vmatpush1.msra.mxu0 0.0
        %1804 = vmatprep.subr.mxu0 0.0
        %1805 = vmatpush1.msra.mxu0 0.0
        %1806 = vmatprep.subr.mxu0 0.0
        %1807 = vmatpush1.msra.mxu0 %v1769
        %1808 = vmatprep.subr.mxu0 0.0
        %1809 = vmatpush1.msra.mxu0 %v1764
        %1810 = vmatprep.subr.mxu0 0.0
        %1811 = vmatpush1.msra.mxu0 %v1759
        %1812 = vmatprep.subr.mxu0 0.0
        %1813 = vmatpush1.msra.mxu0 %v1754
        %1814 = vmatprep.subr.mxu0 0.0
        %1815 = vmatpush2.msra.mxu0 0.0
        %1816 = vmatprep.subr.mxu0 0.0
        %1817 = vmatpush2.msra.mxu0 0.0
        %1818 = vmatprep.subr.mxu0 0.0
        %1819 = vmatpush2.msra.mxu0 0.0
        %1820 = vmatprep.subr.mxu0 0.0
        %1821 = vmatpush2.msra.mxu0 0.0
        %1822 = vmatprep.subr.mxu0 0.0
        %1823 = vmatpush2.msra.mxu0 0.0
        %1824 = vmatprep.subr.mxu0 0.0
        %1825 = vmatpush2.msra.mxu0 0.0
        %1826 = vmatprep.subr.mxu0 0.0
        %1827 = vmatpush2.msra.mxu0 0.0
        %1828 = vmatprep.subr.mxu0 0.0
        %1829 = vmatpush2.msra.mxu0 0.0
        %1830 = vmatprep.subr.mxu0 0.0
        %1831 = vmatpush2.msra.mxu0 0.0
        %1832 = vmatprep.subr.mxu0 0.0
        %1833 = vmatpush2.msra.mxu0 0.0
        %1834 = vmatprep.subr.mxu0 0.0
        %1835 = vmatpush2.msra.mxu0 0.0
        %1836 = vmatprep.subr.mxu0 0.0
        %1837 = vmatpush2.msra.mxu0 0.0
        %1838 = vmatprep.subr.mxu0 0.0
        %1839 = vmatpush2.msra.mxu0 0.0
        %1840 = vmatprep.subr.mxu0 0.0
        %1841 = vmatpush2.msra.mxu0 0.0
        %1842 = vmatprep.subr.mxu0 0.0
        %1843 = vmatpush2.msra.mxu0 0.0
        %1844 = vmatprep.subr.mxu0 0.0
        %1845 = vmatpush2.msra.mxu0 0.0
        %1846 = vmatprep.mubr.f32.mxu0 0.0
        %1847 = vmatmul.mubr.f32.gmra.mxu0 %v1778
        %v1848 = vpop.f32.mrf.mxu0
        %v1849 = vadd.f32 0.0, %v1848
        %v1850 = vpop.f32.mrf.mxu0
        %1851 = vmatprep.mubr.f32.mxu0 0.0
        %1852 = vmatmul.mubr.f32.gmra.mxu0 %v1780
        %v1853 = vpop.f32.mrf.mxu0
        %v1854 = vadd.f32 0.0, %v1853
        %v1855 = vpop.f32.mrf.mxu0
        %1856 = vdwg.mxu0
        %1859 = vrot.lane.b32.xlu0 %v1849, 96
        %v1860 = vpop.permute.xlu0 %1859
        %1861 = vrot.lane.b32.xlu0 %v1854, 96
        %v1862 = vpop.permute.xlu0 %1861
        %1865 = vst.msk [vmem:[%s447] sm:$0xff] %vm1600, %v1860
        %1866 = vst.msk [vmem:[%s447 + $0x8] sm:$0xff] %vm1600, %v1862
        %s1867 = sand.u32 %s274, 1
        %s1868 = scalar_lea.sflag [#allocation4], %s1867
        %s1869 = sand.u32 %s274, 1
        %s1870 = smul.addr %s1869, 16
        %s1871 = scalar_lea.vmem [#allocation10], %s1870
        // Predicated region
        $region81: #{tpu_custom_call.1} parent=63 // pred_check
          %p1872 = pneg %p284
        $region82: #{tpu_custom_call.1} parent=63 // pred_check_branch
          %1874 = sbr.rel (%p1872) target = $region84
        $region83: #{tpu_custom_call.1} parent=63 // pred_region
          %s1876 = ssub.s32 256, 256
          %1877 = vsyncadd %s1868, %s1876
          %s1878 = smul.addr %s30, 2
          %s1879 = smul.addr %s1878, 128
          %s1880 = scalar_lea.hbm %s11, %s1879
          %s1881 = sshll.u32 %s1871, 4
          %s1882 = int_to_ptr.vmem [resolvable:$true] %s1881
          %1887 = dma.vmem_to_hbm [thread:$0]  %s1882, 256, %s1880, %s1868, 128, 128, 8
        $region84: #{tpu_custom_call.1} parent=63 // pred_fallthru
          _
      $region64: #{tpu_custom_call.1} parent=5 // pred_fallthru
        _
      %p1888 = scmp.le.s32.totalorder 2, %s25
      // Predicated region
      $region85: #{tpu_custom_call.1} parent=5 // pred_check
        %p1889 = pneg %p1888
      $region86: #{tpu_custom_call.1} parent=5 // pred_check_branch
        %1891 = sbr.rel (%p1889) target = $region88
      $region87: #{tpu_custom_call.1} parent=5 // pred_region
        %s1892 = ssub.s32 %s25, 2
        // Predicated region
        $region89: #{tpu_custom_call.1} parent=87 // pred_check
          %p1893 = pneg %p290
        $region90: #{tpu_custom_call.1} parent=87 // pred_check_branch
          %1895 = sbr.rel (%p1893) target = $region92
        $region91: #{tpu_custom_call.1} parent=87 // pred_region
          %s1896 = sand.u32 %s275, 1
          %s1897 = scalar_lea.sflag [#allocation4], %s1896
          %s1898 = sand.u32 %s275, 1
          %s1899 = smul.addr %s1898, 16
          %s1900 = scalar_lea.vmem [#allocation10], %s1899
          %1901 = dma.done %s1897, 256
        $region92: #{tpu_custom_call.1} parent=87 // pred_fallthru
          _
      $region88: #{tpu_custom_call.1} parent=5 // pred_fallthru
        _
    $region6: #{tpu_custom_call.1} parent=1 // loop_footer
      %s29 = sadd.s32 1, %s25
    $region7: #{tpu_custom_call.1} parent=1 // loop_footer_branch
      %24 = sbr.rel target = $region3
    $region8: #{tpu_custom_call.1} parent=1 // loop_exit
      _
    %1902 = vsyncpa [#allocation3], 1
    %s1903 = scalar_lea.sflag [#allocation3], 1
    %1904 = vsyncpa %s1903, 1
    %1905 = vsyncpa [#allocation6], 1
    %1906 = vsyncpa [#allocation9], 1
    %1907 = vsyncpa [#allocation4], 1
    %s1908 = scalar_lea.sflag [#allocation4], 1
    %1909 = vsyncpa %s1908, 1

</llo_original>
